<compile_context>
chip_gen: v6e
topology: v6e:2x2x1
jax: 0.10.0
libtpu: 0.0.40
codegen_flags: <defaults>
</compile_context>

<pallas_src>
import jax
import jax.numpy as jnp
from jax.experimental import pallas as pl
from jax.experimental.pallas import tpu as pltpu


def _round_up(n: int, m: int) -> int:
    return (n + m - 1) // m * m


def _cdiv(a: int, b: int) -> int:
    return -(-a // b)


def _choose_tm(B: int, block_m: int) -> int:
    """Pick the batch tile (multiple of 8 sublanes).

    - tiny batches / explicitly tiny block_m: single small tile (test path)
    - >= 256 rows: at least 2 tiles (v7x megacore), each >= 128 rows and
      <= block_m, sized so round-up waste is <= 8 rows per tile.
    """
    B8 = _round_up(B, 8)
    if block_m < 128 or B8 < 256:
        return min(_round_up(block_m, 8), B8)
    n_tiles = max(2, _cdiv(B8, block_m))
    tm = _round_up(_cdiv(B8, n_tiles), 8)
    return max(tm, 128)


def mlp_kernel(x_ref, w1_ref, b1_ref, w2_ref, b2_ref, o_ref):
    # In-kernel f32 -> bf16 cast (free VPU work hidden under the MXU); x is
    # read from HBM exactly once, in its native f32 layout.
    x = x_ref[...].astype(jnp.bfloat16)
    # fc1: (TM, 784) bf16 @ (784, 800) bf16 -> f32 accumulate on the MXU
    h = jnp.dot(x, w1_ref[...], preferred_element_type=jnp.float32)
    h = jnp.maximum(h + b1_ref[...], 0.0)
    # fc3: (TM, 800) bf16 @ (800, 128) bf16 -> f32 accumulate
    logits = jnp.dot(h.astype(jnp.bfloat16), w2_ref[...],
                     preferred_element_type=jnp.float32)
    logits = logits + b2_ref[...]          # padded class lanes carry -1e30 bias
    # numerically stable log_softmax over the (padded) class axis
    m = jnp.max(logits, axis=-1, keepdims=True)
    shifted = logits - m
    lse = jnp.log(jnp.sum(jnp.exp(shifted), axis=-1, keepdims=True))
    o_ref[...] = (shifted - lse).astype(o_ref.dtype)


def prepare_params(w1, b1, w2, b2):
    """One-time pad/cast of the weights (hoisted out of the forward path).

    w1: (784, 800), b1: (800,), w2: (800, 10), b2: (10,) — all f32,
    (in_features, out_features) layout (= nn.Linear.weight.T).
    """
    K, H = w1.shape
    N = w2.shape[1]
    NP = _round_up(N, 128)                                   # 10 -> 128
    w1_p = w1.astype(jnp.bfloat16)                           # (784, 800), no pad
    b1_p = b1.astype(jnp.float32).reshape(1, H)              # (1, 800)
    w2_p = jnp.zeros((H, NP), jnp.bfloat16).at[:, :N].set(w2.astype(jnp.bfloat16))
    # Padded class slots get a huge negative bias so exp(pad) == 0.
    b2_p = jnp.full((1, NP), -1e30, jnp.float32).at[0, :N].set(b2.astype(jnp.float32))
    return w1_p, b1_p, w2_p, b2_p


def two_layer_perceptron(x, w1_p, b1_p, w2_p, b2_p, *, block_m=512,
                         num_classes=10, slice_output=True):
    """x: (B, 784) f32; params from prepare_params(). Returns (B, 10) f32
    log-probabilities (or the padded (BP, 128) block if slice_output=False)."""
    B, K = x.shape
    H = w1_p.shape[1]          # 800
    NP = w2_p.shape[1]         # 128

    TM = _choose_tm(B, block_m)
    grid_m = _cdiv(B, TM)
    BP = grid_m * TM

    # Only pad the batch axis (f32, zero rows); no lane-axis pad of x.
    x_in = x if BP == B else jnp.pad(x, ((0, BP - B), (0, 0)))

    flops = 2 * BP * (K * H + H * NP)
    bytes_accessed = (BP * K * 4 + w1_p.size * 2 + w2_p.size * 2
                      + b1_p.size * 4 + b2_p.size * 4 + BP * NP * 4)

    out = pl.pallas_call(
        mlp_kernel,
        out_shape=jax.ShapeDtypeStruct((BP, NP), jnp.float32),
        grid=(grid_m,),
        in_specs=[
            pl.BlockSpec((TM, K), lambda i: (i, 0)),    # x: one f32 batch tile/step
            pl.BlockSpec((K, H), lambda i: (0, 0)),     # W1: VMEM-resident, unpadded
            pl.BlockSpec((1, H), lambda i: (0, 0)),     # b1: VMEM-resident
            pl.BlockSpec((H, NP), lambda i: (0, 0)),    # W2: VMEM-resident
            pl.BlockSpec((1, NP), lambda i: (0, 0)),    # b2: VMEM-resident
        ],
        out_specs=pl.BlockSpec((TM, NP), lambda i: (i, 0)),
        compiler_params=pltpu.CompilerParams(
            dimension_semantics=("parallel",)),
        cost_estimate=pl.CostEstimate(
            flops=flops,
            transcendentals=BP * (NP + 1),
            bytes_accessed=bytes_accessed),
    )(x_in, w1_p, b1_p, w2_p, b2_p)

    if slice_output:
        # Module-exact (B, 10) result. Downstream consumers that index class
        # logits directly can pass slice_output=False and keep the lane-dense
        # (BP, 128) block to avoid this relayout copy.
        return out[:B, :num_classes]
    return out


def init_params(key):
    """Deterministic init matching nn.Linear's U(-1/sqrt(fan_in), 1/sqrt(fan_in))."""
    k1, k2, k3, k4 = jax.random.split(key, 4)
    bound1 = 1.0 / jnp.sqrt(784.0)
    bound2 = 1.0 / jnp.sqrt(800.0)
    w1 = jax.random.uniform(k1, (784, 800), jnp.float32, -bound1, bound1)
    b1 = jax.random.uniform(k2, (800,), jnp.float32, -bound1, bound1)
    w2 = jax.random.uniform(k3, (800, 10), jnp.float32, -bound2, bound2)
    b2 = jax.random.uniform(k4, (10,), jnp.float32, -bound2, bound2)
    return w1, b1, w2, b2


if __name__ == "__main__":
    key = jax.random.PRNGKey(0)
    k_params, k_x = jax.random.split(key)
    w1, b1, w2, b2 = init_params(k_params)
    params = prepare_params(w1, b1, w2, b2)   # pad/cast once, not per forward

    def ref_forward(x):
        h = jnp.maximum(x @ w1 + b1, 0.0)
        return jax.nn.log_softmax(h @ w2 + b2, axis=1)

    # (B=8, single tile) and (B=24, block_m=8 -> 3-step grid) exercise both the
    # single-tile and multi-tile paths at small, correctness-oriented shapes.
    for B, bm in [(8, 512), (24, 8)]:
        x = jax.random.normal(jax.random.fold_in(k_x, B), (B, 784), jnp.float32)
        out = jax.block_until_ready(
            two_layer_perceptron(x, *params, block_m=bm))
        ref = ref_forward(x)
        assert out.shape == (B, 10)
        # bf16 weights/activations -> loose tolerance vs the pure-f32 reference.
        assert jnp.allclose(out, ref, atol=5e-2, rtol=0.0), \
            float(jnp.max(jnp.abs(out - ref)))
        # log-probabilities must exponentiate to a proper distribution.
        assert jnp.allclose(jnp.sum(jnp.exp(out), axis=1), 1.0, atol=1e-3)

    print("KERNEL_OK")
</pallas_src>

<mosaic_0001>
module attributes {stable_mosaic.version = 11 : i64} {
  func.func @mlp_kernel(%arg0: i32, %arg1: memref<8x784xf32, #tpu.memory_space<vmem>>, %arg2: memref<784x800xbf16, #tpu.memory_space<vmem>>, %arg3: memref<1x800xf32, #tpu.memory_space<vmem>>, %arg4: memref<800x128xbf16, #tpu.memory_space<vmem>>, %arg5: memref<1x128xf32, #tpu.memory_space<vmem>>, %arg6: memref<8x128xf32, #tpu.memory_space<vmem>>) attributes {dimension_semantics = [#tpu.dimension_semantics<parallel>], iteration_bounds = array<i64: 1>, scalar_prefetch = 0 : i64, scratch_operands = 0 : i64, tpu.core_type = #tpu.core_type<tc>, window_params = [{transform_indices = @transform_0, window_bounds = array<i64: 8, 784>}, {pipeline_mode = #tpu.pipeline_mode<synchronous>, transform_indices = @transform_1, window_bounds = array<i64: 784, 800>}, {pipeline_mode = #tpu.pipeline_mode<synchronous>, transform_indices = @transform_2, window_bounds = array<i64: 1, 800>}, {pipeline_mode = #tpu.pipeline_mode<synchronous>, transform_indices = @transform_3, window_bounds = array<i64: 800, 128>}, {pipeline_mode = #tpu.pipeline_mode<synchronous>, transform_indices = @transform_4, window_bounds = array<i64: 1, 128>}, {transform_indices = @transform_5, window_bounds = array<i64: 8, 128>}]} {
    %c0 = arith.constant 0 : index
    %c0_0 = arith.constant 0 : index
    %0 = vector.load %arg1[%c0, %c0_0] : memref<8x784xf32, #tpu.memory_space<vmem>>, vector<8x784xf32>
    %1 = arith.truncf %0 : vector<8x784xf32> to vector<8x784xbf16>
    %c0_1 = arith.constant 0 : index
    %c0_2 = arith.constant 0 : index
    %2 = vector.load %arg2[%c0_1, %c0_2] : memref<784x800xbf16, #tpu.memory_space<vmem>>, vector<784x800xbf16>
    %cst = arith.constant dense<0.000000e+00> : vector<8x800xf32>
    %3 = tpu.matmul %1, %2, %cst {dimension_numbers = #tpu.dot_dimension_numbers<[1], [0], [0], [1], [0, 0, 1, 1], [], []>} : vector<8x784xbf16>, vector<784x800xbf16>, vector<8x800xf32> -> vector<8x800xf32>
    %c0_3 = arith.constant 0 : index
    %c0_4 = arith.constant 0 : index
    %4 = vector.load %arg3[%c0_3, %c0_4] : memref<1x800xf32, #tpu.memory_space<vmem>>, vector<1x800xf32>
    %5 = vector.broadcast %4 : vector<1x800xf32> to vector<8x800xf32>
    %6 = arith.addf %3, %5 : vector<8x800xf32>
    %cst_5 = arith.constant 0.000000e+00 : f32
    %7 = vector.broadcast %cst_5 : f32 to vector<8x800xf32>
    %8 = arith.maximumf %6, %7 : vector<8x800xf32>
    %9 = arith.truncf %8 : vector<8x800xf32> to vector<8x800xbf16>
    %c0_6 = arith.constant 0 : index
    %c0_7 = arith.constant 0 : index
    %10 = vector.load %arg4[%c0_6, %c0_7] : memref<800x128xbf16, #tpu.memory_space<vmem>>, vector<800x128xbf16>
    %cst_8 = arith.constant dense<0.000000e+00> : vector<8x128xf32>
    %11 = tpu.matmul %9, %10, %cst_8 {dimension_numbers = #tpu.dot_dimension_numbers<[1], [0], [0], [1], [0, 0, 1, 1], [], []>} : vector<8x800xbf16>, vector<800x128xbf16>, vector<8x128xf32> -> vector<8x128xf32>
    %c0_9 = arith.constant 0 : index
    %c0_10 = arith.constant 0 : index
    %12 = vector.load %arg5[%c0_9, %c0_10] : memref<1x128xf32, #tpu.memory_space<vmem>>, vector<1x128xf32>
    %13 = vector.broadcast %12 : vector<1x128xf32> to vector<8x128xf32>
    %14 = arith.addf %11, %13 : vector<8x128xf32>
    %cst_11 = arith.constant dense<0xFF800000> : vector<8xf32>
    %15 = vector.multi_reduction <maximumf>, %14, %cst_11 [1] : vector<8x128xf32> to vector<8xf32>
    %16 = vector.shape_cast %15 : vector<8xf32> to vector<8x1xf32>
    %17 = vector.broadcast %16 : vector<8x1xf32> to vector<8x128xf32>
    %18 = arith.subf %14, %17 : vector<8x128xf32>
    %19 = math.exp %18 : vector<8x128xf32>
    %cst_12 = arith.constant dense<0.000000e+00> : vector<8xf32>
    %20 = vector.multi_reduction <add>, %19, %cst_12 [1] : vector<8x128xf32> to vector<8xf32>
    %21 = vector.shape_cast %20 : vector<8xf32> to vector<8x1xf32>
    %22 = math.log %21 : vector<8x1xf32>
    %23 = vector.broadcast %22 : vector<8x1xf32> to vector<8x128xf32>
    %24 = arith.subf %18, %23 : vector<8x128xf32>
    %c0_13 = arith.constant 0 : index
    %c0_14 = arith.constant 0 : index
    %25 = vector.load %arg6[%c0_13, %c0_14] : memref<8x128xf32, #tpu.memory_space<vmem>>, vector<8x128xf32>
    tpu.vector_store %arg6[%c0_13, %c0_14], %24 {strides = array<i32>} : memref<8x128xf32, #tpu.memory_space<vmem>>, vector<8x128xf32>,
    return
  }
  func.func @transform_0(%arg0: i32) -> (i32, i32) {
    %c0_i32 = arith.constant 0 : i32
    %c0_i32_0 = arith.constant 0 : i32
    return %arg0, %c0_i32 : i32, i32
  }
  func.func @transform_1(%arg0: i32) -> (i32, i32) {
    %c0_i32 = arith.constant 0 : i32
    %c0_i32_0 = arith.constant 0 : i32
    %c0_i32_1 = arith.constant 0 : i32
    return %c0_i32, %c0_i32_0 : i32, i32
  }
  func.func @transform_2(%arg0: i32) -> (i32, i32) {
    %c0_i32 = arith.constant 0 : i32
    %c0_i32_0 = arith.constant 0 : i32
    %c0_i32_1 = arith.constant 0 : i32
    return %c0_i32, %c0_i32_0 : i32, i32
  }
  func.func @transform_3(%arg0: i32) -> (i32, i32) {
    %c0_i32 = arith.constant 0 : i32
    %c0_i32_0 = arith.constant 0 : i32
    %c0_i32_1 = arith.constant 0 : i32
    return %c0_i32, %c0_i32_0 : i32, i32
  }
  func.func @transform_4(%arg0: i32) -> (i32, i32) {
    %c0_i32 = arith.constant 0 : i32
    %c0_i32_0 = arith.constant 0 : i32
    %c0_i32_1 = arith.constant 0 : i32
    return %c0_i32, %c0_i32_0 : i32, i32
  }
  func.func @transform_5(%arg0: i32) -> (i32, i32) {
    %c0_i32 = arith.constant 0 : i32
    %c0_i32_0 = arith.constant 0 : i32
    return %arg0, %c0_i32 : i32, i32
  }
}

</mosaic_0001>

<llo_original>
// kernel: tpu_custom_call.1
$region0: #{tpu_custom_call.1}
  #allocation0 [shape = 'u32[]', space=smem, size = 0x4, offset = 0x4, fixed_abs, tag = 'smem constant byte address 0x4 - core index']
  #allocation1 [shape = 'u32[144,128]{1,0:T(1,128)}', space=vmem, size = 0x12000, scoped, tag = 'internal scratch']
  %s0 = inlined_call_operand.hbm [shape: f32[8,784], index: 0, kind: input, shape index: {}]
  %s1 = inlined_call_operand.hbm [shape: bf16[784,800], index: 1, kind: input, shape index: {}]
  %s2 = inlined_call_operand.hbm [shape: f32[1,800], index: 2, kind: input, shape index: {}]
  %s3 = inlined_call_operand.hbm [shape: bf16[800,128], index: 3, kind: input, shape index: {}]
  %s4 = inlined_call_operand.hbm [shape: f32[1,128], index: 4, kind: input, shape index: {}]
  %s5 = inlined_call_operand.hbm [shape: f32[8,128], index: 5, kind: output, shape index: {}]
  %s6 = sld [smem:[#allocation0]]
  $region50: #{tpu_custom_call.1} parent=0
    _
  %s8 = ssub.s32 1, %s6
  %s9 = scalar_select 0, %s8, %s6
  $region1: #{tpu_custom_call.1} parent=0
    #allocation2 [shape = 'u8[28672]{0}', space=vmem, size = 0x7000, scoped, tag = 'input window, operand 0, single buffered']
    #allocation3 [shape = 's32[1]{0}', space=sflag, size = 0x4, scoped, tag = 'scoped memory for tpu_custom_call.1']
    #allocation4 [shape = 's32[1]{0}', space=sflag, size = 0x4, scoped, tag = 'scoped memory for tpu_custom_call.1']
    #allocation5 [shape = 'u8[1404928]{0}', space=vmem, size = 0x157000, scoped, tag = 'input window, operand 1, single buffered']
    #allocation6 [shape = 's32[1]{0}', space=sflag, size = 0x4, scoped, tag = 'scoped memory for tpu_custom_call.1']
    #allocation7 [shape = 'u8[3584]{0}', space=vmem, size = 0x1000, scoped, tag = 'input window, operand 2, single buffered']
    #allocation8 [shape = 'u8[204800]{0}', space=vmem, size = 0x32000, scoped, tag = 'input window, operand 3, single buffered']
    #allocation9 [shape = 's32[1]{0}', space=sflag, size = 0x4, scoped, tag = 'scoped memory for tpu_custom_call.1']
    #allocation10 [shape = 'u8[512]{0}', space=vmem, size = 0x400, scoped, tag = 'input window, operand 4, single buffered']
    #allocation11 [shape = 'u8[4096]{0}', space=vmem, size = 0x1000, scoped, tag = 'output window, operand 0, single buffered']
    %10 = vsyncpa [#allocation3], 0
    %11 = vsyncpa [#allocation6], 0
    %12 = vsyncpa [#allocation9], 0
    %13 = vsyncpa [#allocation4], 0
    // Predicated region
    $region2: #{tpu_custom_call.1} parent=1 // pred_check
      _
    $region3: #{tpu_custom_call.1} parent=1 // pred_check_branch
      %15 = sbr.rel (0) target = $region5
    $region4: #{tpu_custom_call.1} parent=1 // pred_region
      %s17 = ssub.s32 896, 896
      %18 = vsyncadd [#allocation3], %s17
      %s20 = sshll.u32 [#allocation2], 4
      %s21 = int_to_ptr.vmem [resolvable:$true] %s20
      %23 = dma.hbm_to_vmem [thread:$0]  %s0, 896, %s21, [#allocation3]
    $region5: #{tpu_custom_call.1} parent=1 // pred_fallthru
      _
    // Predicated region
    $region6: #{tpu_custom_call.1} parent=1 // pred_check
      _
    $region7: #{tpu_custom_call.1} parent=1 // pred_check_branch
      %25 = sbr.rel (0) target = $region9
    $region8: #{tpu_custom_call.1} parent=1 // pred_region
      %s27 = ssub.s32 43904, 43904
      %28 = vsyncadd [#allocation6], %s27
      %s29 = sshll.u32 [#allocation5], 4
      %s30 = int_to_ptr.vmem [resolvable:$true] %s29
      %35 = dma.hbm_to_vmem [thread:$0]  %s1, 43904, %s30, [#allocation6], 448, 448, 28
    $region9: #{tpu_custom_call.1} parent=1 // pred_fallthru
      _
    // Predicated region
    $region10: #{tpu_custom_call.1} parent=1 // pred_check
      _
    $region11: #{tpu_custom_call.1} parent=1 // pred_check_branch
      %37 = sbr.rel (0) target = $region13
    $region12: #{tpu_custom_call.1} parent=1 // pred_region
      %s39 = ssub.s32 112, 112
      %40 = vsyncadd [#allocation6], %s39
      %s42 = sshll.u32 [#allocation7], 4
      %s43 = int_to_ptr.vmem [resolvable:$true] %s42
      %45 = dma.hbm_to_vmem [thread:$0]  %s2, 112, %s43, [#allocation6]
    $region13: #{tpu_custom_call.1} parent=1 // pred_fallthru
      _
    // Predicated region
    $region14: #{tpu_custom_call.1} parent=1 // pred_check
      _
    $region15: #{tpu_custom_call.1} parent=1 // pred_check_branch
      %47 = sbr.rel (0) target = $region17
    $region16: #{tpu_custom_call.1} parent=1 // pred_region
      %s49 = ssub.s32 6400, 6400
      %50 = vsyncadd [#allocation9], %s49
      %s51 = sshll.u32 [#allocation8], 4
      %s52 = int_to_ptr.vmem [resolvable:$true] %s51
      %57 = dma.hbm_to_vmem [thread:$0]  %s3, 6400, %s52, [#allocation9], 64, 64, 4
    $region17: #{tpu_custom_call.1} parent=1 // pred_fallthru
      _
    // Predicated region
    $region18: #{tpu_custom_call.1} parent=1 // pred_check
      _
    $region19: #{tpu_custom_call.1} parent=1 // pred_check_branch
      %59 = sbr.rel (0) target = $region21
    $region20: #{tpu_custom_call.1} parent=1 // pred_region
      %s61 = ssub.s32 16, 16
      %62 = vsyncadd [#allocation9], %s61
      %s64 = sshll.u32 [#allocation10], 4
      %s65 = int_to_ptr.vmem [resolvable:$true] %s64
      %67 = dma.hbm_to_vmem [thread:$0]  %s4, 16, %s65, [#allocation9]
    $region21: #{tpu_custom_call.1} parent=1 // pred_fallthru
      _
    // Predicated region
    $region22: #{tpu_custom_call.1} parent=1 // pred_check
      _
    $region23: #{tpu_custom_call.1} parent=1 // pred_check_branch
      %69 = sbr.rel (0) target = $region25
    $region24: #{tpu_custom_call.1} parent=1 // pred_region
      %70 = dma.done [#allocation3], 896
    $region25: #{tpu_custom_call.1} parent=1 // pred_fallthru
      _
    // Predicated region
    $region26: #{tpu_custom_call.1} parent=1 // pred_check
      _
    $region27: #{tpu_custom_call.1} parent=1 // pred_check_branch
      %72 = sbr.rel (0) target = $region29
    $region28: #{tpu_custom_call.1} parent=1 // pred_region
      %73 = dma.done [#allocation6], 43904
    $region29: #{tpu_custom_call.1} parent=1 // pred_fallthru
      _
    // Predicated region
    $region30: #{tpu_custom_call.1} parent=1 // pred_check
      _
    $region31: #{tpu_custom_call.1} parent=1 // pred_check_branch
      %75 = sbr.rel (0) target = $region33
    $region32: #{tpu_custom_call.1} parent=1 // pred_region
      %76 = dma.done [#allocation6], 112
    $region33: #{tpu_custom_call.1} parent=1 // pred_fallthru
      _
    // Predicated region
    $region34: #{tpu_custom_call.1} parent=1 // pred_check
      _
    $region35: #{tpu_custom_call.1} parent=1 // pred_check_branch
      %78 = sbr.rel (0) target = $region37
    $region36: #{tpu_custom_call.1} parent=1 // pred_region
      %79 = dma.done [#allocation9], 6400
    $region37: #{tpu_custom_call.1} parent=1 // pred_fallthru
      _
    // Predicated region
    $region38: #{tpu_custom_call.1} parent=1 // pred_check
      _
    $region39: #{tpu_custom_call.1} parent=1 // pred_check_branch
      %81 = sbr.rel (0) target = $region41
    $region40: #{tpu_custom_call.1} parent=1 // pred_region
      %82 = dma.done [#allocation9], 16
    $region41: #{tpu_custom_call.1} parent=1 // pred_fallthru
      _
    %v84 = vld [vmem:[#allocation2] sm:$0xff]
    %v85 = vld [vmem:[#allocation2 + $0x8] sm:$0xff]
    %v86 = vld [vmem:[#allocation2 + $0x10] sm:$0xff]
    %v87 = vld [vmem:[#allocation2 + $0x18] sm:$0xff]
    %v88 = vld [vmem:[#allocation2 + $0x20] sm:$0xff]
    %v89 = vld [vmem:[#allocation2 + $0x28] sm:$0xff]
    %v90 = vld [vmem:[#allocation2 + $0x30] sm:$0xff]
    %v91 = vpack.c.bf16 %v84, %v84
    %v92 = vpack.c.bf16 %v85, %v85
    %v93 = vpack.c.bf16 %v86, %v86
    %v94 = vpack.c.bf16 %v87, %v87
    %v95 = vpack.c.bf16 %v88, %v88
    %v96 = vpack.c.bf16 %v89, %v89
    %v97 = vpack.c.bf16 %v90, %v90
    %v98 = vld [vmem:[#allocation5] sm:$0xff]
    %v99 = vld [vmem:[#allocation5 + $0x8] sm:$0xff]
    %v100 = vld [vmem:[#allocation5 + $0x10] sm:$0xff]
    %v101 = vld [vmem:[#allocation5 + $0x18] sm:$0xf]
    %v102 = vld [vmem:[#allocation5 + $0x1c] sm:$0xff]
    %v103 = vld [vmem:[#allocation5 + $0x24] sm:$0xff]
    %v104 = vld [vmem:[#allocation5 + $0x2c] sm:$0xff]
    %v105 = vld [vmem:[#allocation5 + $0x34] sm:$0xf]
    %v106 = vld [vmem:[#allocation5 + $0x38] sm:$0xff]
    %v107 = vld [vmem:[#allocation5 + $0x40] sm:$0xff]
    %v108 = vld [vmem:[#allocation5 + $0x48] sm:$0xff]
    %v109 = vld [vmem:[#allocation5 + $0x50] sm:$0xf]
    %v110 = vld [vmem:[#allocation5 + $0x54] sm:$0xff]
    %v111 = vld [vmem:[#allocation5 + $0x5c] sm:$0xff]
    %v112 = vld [vmem:[#allocation5 + $0x64] sm:$0xff]
    %v113 = vld [vmem:[#allocation5 + $0x6c] sm:$0xf]
    %v114 = vld [vmem:[#allocation5 + $0x70] sm:$0xff]
    %v115 = vld [vmem:[#allocation5 + $0x78] sm:$0xff]
    %v116 = vld [vmem:[#allocation5 + $0x80] sm:$0xff]
    %v117 = vld [vmem:[#allocation5 + $0x88] sm:$0xf]
    %v118 = vld [vmem:[#allocation5 + $0x8c] sm:$0xff]
    %v119 = vld [vmem:[#allocation5 + $0x94] sm:$0xff]
    %v120 = vld [vmem:[#allocation5 + $0x9c] sm:$0xff]
    %v121 = vld [vmem:[#allocation5 + $0xa4] sm:$0xf]
    %v122 = vld [vmem:[#allocation5 + $0xa8] sm:$0xff]
    %v123 = vld [vmem:[#allocation5 + $0xb0] sm:$0xff]
    %v124 = vld [vmem:[#allocation5 + $0xb8] sm:$0xff]
    %v125 = vld [vmem:[#allocation5 + $0xc0] sm:$0xf]
    %v126 = vld [vmem:[#allocation5 + $0xc4] sm:$0xff]
    %v127 = vld [vmem:[#allocation5 + $0xcc] sm:$0xff]
    %v128 = vld [vmem:[#allocation5 + $0xd4] sm:$0xff]
    %v129 = vld [vmem:[#allocation5 + $0xdc] sm:$0xf]
    %v130 = vld [vmem:[#allocation5 + $0xe0] sm:$0xff]
    %v131 = vld [vmem:[#allocation5 + $0xe8] sm:$0xff]
    %v132 = vld [vmem:[#allocation5 + $0xf0] sm:$0xff]
    %v133 = vld [vmem:[#allocation5 + $0xf8] sm:$0xf]
    %v134 = vld [vmem:[#allocation5 + $0xfc] sm:$0xff]
    %v135 = vld [vmem:[#allocation5 + $0x104] sm:$0xff]
    %v136 = vld [vmem:[#allocation5 + $0x10c] sm:$0xff]
    %v137 = vld [vmem:[#allocation5 + $0x114] sm:$0xf]
    %v138 = vld [vmem:[#allocation5 + $0x118] sm:$0xff]
    %v139 = vld [vmem:[#allocation5 + $0x120] sm:$0xff]
    %v140 = vld [vmem:[#allocation5 + $0x128] sm:$0xff]
    %v141 = vld [vmem:[#allocation5 + $0x130] sm:$0xf]
    %v142 = vld [vmem:[#allocation5 + $0x134] sm:$0xff]
    %v143 = vld [vmem:[#allocation5 + $0x13c] sm:$0xff]
    %v144 = vld [vmem:[#allocation5 + $0x144] sm:$0xff]
    %v145 = vld [vmem:[#allocation5 + $0x14c] sm:$0xf]
    %v146 = vld [vmem:[#allocation5 + $0x150] sm:$0xff]
    %v147 = vld [vmem:[#allocation5 + $0x158] sm:$0xff]
    %v148 = vld [vmem:[#allocation5 + $0x160] sm:$0xff]
    %v149 = vld [vmem:[#allocation5 + $0x168] sm:$0xf]
    %v150 = vld [vmem:[#allocation5 + $0x16c] sm:$0xff]
    %v151 = vld [vmem:[#allocation5 + $0x174] sm:$0xff]
    %v152 = vld [vmem:[#allocation5 + $0x17c] sm:$0xff]
    %v153 = vld [vmem:[#allocation5 + $0x184] sm:$0xf]
    %v154 = vld [vmem:[#allocation5 + $0x188] sm:$0xff]
    %v155 = vld [vmem:[#allocation5 + $0x190] sm:$0xff]
    %v156 = vld [vmem:[#allocation5 + $0x198] sm:$0xff]
    %v157 = vld [vmem:[#allocation5 + $0x1a0] sm:$0xf]
    %v158 = vld [vmem:[#allocation5 + $0x1a4] sm:$0xff]
    %v159 = vld [vmem:[#allocation5 + $0x1ac] sm:$0xff]
    %v160 = vld [vmem:[#allocation5 + $0x1b4] sm:$0xff]
    %v161 = vld [vmem:[#allocation5 + $0x1bc] sm:$0xf]
    %v162 = vld [vmem:[#allocation5 + $0x1c0] sm:$0xff]
    %v163 = vld [vmem:[#allocation5 + $0x1c8] sm:$0xff]
    %v164 = vld [vmem:[#allocation5 + $0x1d0] sm:$0xff]
    %v165 = vld [vmem:[#allocation5 + $0x1d8] sm:$0xf]
    %v166 = vld [vmem:[#allocation5 + $0x1dc] sm:$0xff]
    %v167 = vld [vmem:[#allocation5 + $0x1e4] sm:$0xff]
    %v168 = vld [vmem:[#allocation5 + $0x1ec] sm:$0xff]
    %v169 = vld [vmem:[#allocation5 + $0x1f4] sm:$0xf]
    %v170 = vld [vmem:[#allocation5 + $0x1f8] sm:$0xff]
    %v171 = vld [vmem:[#allocation5 + $0x200] sm:$0xff]
    %v172 = vld [vmem:[#allocation5 + $0x208] sm:$0xff]
    %v173 = vld [vmem:[#allocation5 + $0x210] sm:$0xf]
    %v174 = vld [vmem:[#allocation5 + $0x214] sm:$0xff]
    %v175 = vld [vmem:[#allocation5 + $0x21c] sm:$0xff]
    %v176 = vld [vmem:[#allocation5 + $0x224] sm:$0xff]
    %v177 = vld [vmem:[#allocation5 + $0x22c] sm:$0xf]
    %v178 = vld [vmem:[#allocation5 + $0x230] sm:$0xff]
    %v179 = vld [vmem:[#allocation5 + $0x238] sm:$0xff]
    %v180 = vld [vmem:[#allocation5 + $0x240] sm:$0xff]
    %v181 = vld [vmem:[#allocation5 + $0x248] sm:$0xf]
    %v182 = vld [vmem:[#allocation5 + $0x24c] sm:$0xff]
    %v183 = vld [vmem:[#allocation5 + $0x254] sm:$0xff]
    %v184 = vld [vmem:[#allocation5 + $0x25c] sm:$0xff]
    %v185 = vld [vmem:[#allocation5 + $0x264] sm:$0xf]
    %v186 = vld [vmem:[#allocation5 + $0x268] sm:$0xff]
    %v187 = vld [vmem:[#allocation5 + $0x270] sm:$0xff]
    %v188 = vld [vmem:[#allocation5 + $0x278] sm:$0xff]
    %v189 = vld [vmem:[#allocation5 + $0x280] sm:$0xf]
    %v190 = vld [vmem:[#allocation5 + $0x284] sm:$0xff]
    %v191 = vld [vmem:[#allocation5 + $0x28c] sm:$0xff]
    %v192 = vld [vmem:[#allocation5 + $0x294] sm:$0xff]
    %v193 = vld [vmem:[#allocation5 + $0x29c] sm:$0xf]
    %v194 = vld [vmem:[#allocation5 + $0x2a0] sm:$0xff]
    %v195 = vld [vmem:[#allocation5 + $0x2a8] sm:$0xff]
    %v196 = vld [vmem:[#allocation5 + $0x2b0] sm:$0xff]
    %v197 = vld [vmem:[#allocation5 + $0x2b8] sm:$0xf]
    %v198 = vld [vmem:[#allocation5 + $0x2bc] sm:$0xff]
    %v199 = vld [vmem:[#allocation5 + $0x2c4] sm:$0xff]
    %v200 = vld [vmem:[#allocation5 + $0x2cc] sm:$0xff]
    %v201 = vld [vmem:[#allocation5 + $0x2d4] sm:$0xf]
    %v202 = vld [vmem:[#allocation5 + $0x2d8] sm:$0xff]
    %v203 = vld [vmem:[#allocation5 + $0x2e0] sm:$0xff]
    %v204 = vld [vmem:[#allocation5 + $0x2e8] sm:$0xff]
    %v205 = vld [vmem:[#allocation5 + $0x2f0] sm:$0xf]
    %v206 = vld [vmem:[#allocation5 + $0x2f4] sm:$0xff]
    %v207 = vld [vmem:[#allocation5 + $0x2fc] sm:$0xff]
    %v208 = vld [vmem:[#allocation5 + $0x304] sm:$0xff]
    %v209 = vld [vmem:[#allocation5 + $0x30c] sm:$0xf]
    %v210 = vld [vmem:[#allocation5 + $0x310] sm:$0xff]
    %v211 = vld [vmem:[#allocation5 + $0x318] sm:$0xff]
    %v212 = vld [vmem:[#allocation5 + $0x320] sm:$0xff]
    %v213 = vld [vmem:[#allocation5 + $0x328] sm:$0xf]
    %v214 = vld [vmem:[#allocation5 + $0x32c] sm:$0xff]
    %v215 = vld [vmem:[#allocation5 + $0x334] sm:$0xff]
    %v216 = vld [vmem:[#allocation5 + $0x33c] sm:$0xff]
    %v217 = vld [vmem:[#allocation5 + $0x344] sm:$0xf]
    %v218 = vld [vmem:[#allocation5 + $0x348] sm:$0xff]
    %v219 = vld [vmem:[#allocation5 + $0x350] sm:$0xff]
    %v220 = vld [vmem:[#allocation5 + $0x358] sm:$0xff]
    %v221 = vld [vmem:[#allocation5 + $0x360] sm:$0xf]
    %v222 = vld [vmem:[#allocation5 + $0x364] sm:$0xff]
    %v223 = vld [vmem:[#allocation5 + $0x36c] sm:$0xff]
    %v224 = vld [vmem:[#allocation5 + $0x374] sm:$0xff]
    %v225 = vld [vmem:[#allocation5 + $0x37c] sm:$0xf]
    %v226 = vld [vmem:[#allocation5 + $0x380] sm:$0xff]
    %v227 = vld [vmem:[#allocation5 + $0x388] sm:$0xff]
    %v228 = vld [vmem:[#allocation5 + $0x390] sm:$0xff]
    %v229 = vld [vmem:[#allocation5 + $0x398] sm:$0xf]
    %v230 = vld [vmem:[#allocation5 + $0x39c] sm:$0xff]
    %v231 = vld [vmem:[#allocation5 + $0x3a4] sm:$0xff]
    %v232 = vld [vmem:[#allocation5 + $0x3ac] sm:$0xff]
    %v233 = vld [vmem:[#allocation5 + $0x3b4] sm:$0xf]
    %v234 = vld [vmem:[#allocation5 + $0x3b8] sm:$0xff]
    %v235 = vld [vmem:[#allocation5 + $0x3c0] sm:$0xff]
    %v236 = vld [vmem:[#allocation5 + $0x3c8] sm:$0xff]
    %v237 = vld [vmem:[#allocation5 + $0x3d0] sm:$0xf]
    %v238 = vld [vmem:[#allocation5 + $0x3d4] sm:$0xff]
    %v239 = vld [vmem:[#allocation5 + $0x3dc] sm:$0xff]
    %v240 = vld [vmem:[#allocation5 + $0x3e4] sm:$0xff]
    %v241 = vld [vmem:[#allocation5 + $0x3ec] sm:$0xf]
    %v242 = vld [vmem:[#allocation5 + $0x3f0] sm:$0xff]
    %v243 = vld [vmem:[#allocation5 + $0x3f8] sm:$0xff]
    %v244 = vld [vmem:[#allocation5 + $0x400] sm:$0xff]
    %v245 = vld [vmem:[#allocation5 + $0x408] sm:$0xf]
    %v246 = vld [vmem:[#allocation5 + $0x40c] sm:$0xff]
    %v247 = vld [vmem:[#allocation5 + $0x414] sm:$0xff]
    %v248 = vld [vmem:[#allocation5 + $0x41c] sm:$0xff]
    %v249 = vld [vmem:[#allocation5 + $0x424] sm:$0xf]
    %v250 = vld [vmem:[#allocation5 + $0x428] sm:$0xff]
    %v251 = vld [vmem:[#allocation5 + $0x430] sm:$0xff]
    %v252 = vld [vmem:[#allocation5 + $0x438] sm:$0xff]
    %v253 = vld [vmem:[#allocation5 + $0x440] sm:$0xf]
    %v254 = vld [vmem:[#allocation5 + $0x444] sm:$0xff]
    %v255 = vld [vmem:[#allocation5 + $0x44c] sm:$0xff]
    %v256 = vld [vmem:[#allocation5 + $0x454] sm:$0xff]
    %v257 = vld [vmem:[#allocation5 + $0x45c] sm:$0xf]
    %v258 = vld [vmem:[#allocation5 + $0x460] sm:$0xff]
    %v259 = vld [vmem:[#allocation5 + $0x468] sm:$0xff]
    %v260 = vld [vmem:[#allocation5 + $0x470] sm:$0xff]
    %v261 = vld [vmem:[#allocation5 + $0x478] sm:$0xf]
    %v262 = vld [vmem:[#allocation5 + $0x47c] sm:$0xff]
    %v263 = vld [vmem:[#allocation5 + $0x484] sm:$0xff]
    %v264 = vld [vmem:[#allocation5 + $0x48c] sm:$0xff]
    %v265 = vld [vmem:[#allocation5 + $0x494] sm:$0xf]
    %v266 = vld [vmem:[#allocation5 + $0x498] sm:$0xff]
    %v267 = vld [vmem:[#allocation5 + $0x4a0] sm:$0xff]
    %v268 = vld [vmem:[#allocation5 + $0x4a8] sm:$0xff]
    %v269 = vld [vmem:[#allocation5 + $0x4b0] sm:$0xf]
    %v270 = vld [vmem:[#allocation5 + $0x4b4] sm:$0xff]
    %v271 = vld [vmem:[#allocation5 + $0x4bc] sm:$0xff]
    %v272 = vld [vmem:[#allocation5 + $0x4c4] sm:$0xff]
    %v273 = vld [vmem:[#allocation5 + $0x4cc] sm:$0xf]
    %v274 = vld [vmem:[#allocation5 + $0x4d0] sm:$0xff]
    %v275 = vld [vmem:[#allocation5 + $0x4d8] sm:$0xff]
    %v276 = vld [vmem:[#allocation5 + $0x4e0] sm:$0xff]
    %v277 = vld [vmem:[#allocation5 + $0x4e8] sm:$0xf]
    %v278 = vld [vmem:[#allocation5 + $0x4ec] sm:$0xff]
    %v279 = vld [vmem:[#allocation5 + $0x4f4] sm:$0xff]
    %v280 = vld [vmem:[#allocation5 + $0x4fc] sm:$0xff]
    %v281 = vld [vmem:[#allocation5 + $0x504] sm:$0xf]
    %v282 = vld [vmem:[#allocation5 + $0x508] sm:$0xff]
    %v283 = vld [vmem:[#allocation5 + $0x510] sm:$0xff]
    %v284 = vld [vmem:[#allocation5 + $0x518] sm:$0xff]
    %v285 = vld [vmem:[#allocation5 + $0x520] sm:$0xf]
    %v286 = vld [vmem:[#allocation5 + $0x524] sm:$0xff]
    %v287 = vld [vmem:[#allocation5 + $0x52c] sm:$0xff]
    %v288 = vld [vmem:[#allocation5 + $0x534] sm:$0xff]
    %v289 = vld [vmem:[#allocation5 + $0x53c] sm:$0xf]
    %v290 = vld [vmem:[#allocation5 + $0x540] sm:$0xff]
    %v291 = vld [vmem:[#allocation5 + $0x548] sm:$0xff]
    %v292 = vld [vmem:[#allocation5 + $0x550] sm:$0xff]
    %v293 = vld [vmem:[#allocation5 + $0x558] sm:$0xf]
    %v294 = vld [vmem:[#allocation5 + $0x55c] sm:$0xff]
    %v295 = vld [vmem:[#allocation5 + $0x564] sm:$0xff]
    %v296 = vld [vmem:[#allocation5 + $0x56c] sm:$0xff]
    %v297 = vld [vmem:[#allocation5 + $0x574] sm:$0xf]
    %v298 = vld [vmem:[#allocation5 + $0x578] sm:$0xff]
    %v299 = vld [vmem:[#allocation5 + $0x580] sm:$0xff]
    %v300 = vld [vmem:[#allocation5 + $0x588] sm:$0xff]
    %v301 = vld [vmem:[#allocation5 + $0x590] sm:$0xf]
    %v302 = vld [vmem:[#allocation5 + $0x594] sm:$0xff]
    %v303 = vld [vmem:[#allocation5 + $0x59c] sm:$0xff]
    %v304 = vld [vmem:[#allocation5 + $0x5a4] sm:$0xff]
    %v305 = vld [vmem:[#allocation5 + $0x5ac] sm:$0xf]
    %v306 = vld [vmem:[#allocation5 + $0x5b0] sm:$0xff]
    %v307 = vld [vmem:[#allocation5 + $0x5b8] sm:$0xff]
    %v308 = vld [vmem:[#allocation5 + $0x5c0] sm:$0xff]
    %v309 = vld [vmem:[#allocation5 + $0x5c8] sm:$0xf]
    %v310 = vld [vmem:[#allocation5 + $0x5cc] sm:$0xff]
    %v311 = vld [vmem:[#allocation5 + $0x5d4] sm:$0xff]
    %v312 = vld [vmem:[#allocation5 + $0x5dc] sm:$0xff]
    %v313 = vld [vmem:[#allocation5 + $0x5e4] sm:$0xf]
    %v314 = vld [vmem:[#allocation5 + $0x5e8] sm:$0xff]
    %v315 = vld [vmem:[#allocation5 + $0x5f0] sm:$0xff]
    %v316 = vld [vmem:[#allocation5 + $0x5f8] sm:$0xff]
    %v317 = vld [vmem:[#allocation5 + $0x600] sm:$0xf]
    %v318 = vld [vmem:[#allocation5 + $0x604] sm:$0xff]
    %v319 = vld [vmem:[#allocation5 + $0x60c] sm:$0xff]
    %v320 = vld [vmem:[#allocation5 + $0x614] sm:$0xff]
    %v321 = vld [vmem:[#allocation5 + $0x61c] sm:$0xf]
    %v322 = vld [vmem:[#allocation5 + $0x620] sm:$0xff]
    %v323 = vld [vmem:[#allocation5 + $0x628] sm:$0xff]
    %v324 = vld [vmem:[#allocation5 + $0x630] sm:$0xff]
    %v325 = vld [vmem:[#allocation5 + $0x638] sm:$0xf]
    %v326 = vld [vmem:[#allocation5 + $0x63c] sm:$0xff]
    %v327 = vld [vmem:[#allocation5 + $0x644] sm:$0xff]
    %v328 = vld [vmem:[#allocation5 + $0x64c] sm:$0xff]
    %v329 = vld [vmem:[#allocation5 + $0x654] sm:$0xf]
    %v330 = vld [vmem:[#allocation5 + $0x658] sm:$0xff]
    %v331 = vld [vmem:[#allocation5 + $0x660] sm:$0xff]
    %v332 = vld [vmem:[#allocation5 + $0x668] sm:$0xff]
    %v333 = vld [vmem:[#allocation5 + $0x670] sm:$0xf]
    %v334 = vld [vmem:[#allocation5 + $0x674] sm:$0xff]
    %v335 = vld [vmem:[#allocation5 + $0x67c] sm:$0xff]
    %v336 = vld [vmem:[#allocation5 + $0x684] sm:$0xff]
    %v337 = vld [vmem:[#allocation5 + $0x68c] sm:$0xf]
    %v338 = vld [vmem:[#allocation5 + $0x690] sm:$0xff]
    %v339 = vld [vmem:[#allocation5 + $0x698] sm:$0xff]
    %v340 = vld [vmem:[#allocation5 + $0x6a0] sm:$0xff]
    %v341 = vld [vmem:[#allocation5 + $0x6a8] sm:$0xf]
    %v342 = vld [vmem:[#allocation5 + $0x6ac] sm:$0xff]
    %v343 = vld [vmem:[#allocation5 + $0x6b4] sm:$0xff]
    %v344 = vld [vmem:[#allocation5 + $0x6bc] sm:$0xff]
    %v345 = vld [vmem:[#allocation5 + $0x6c4] sm:$0xf]
    %v346 = vld [vmem:[#allocation5 + $0x6c8] sm:$0xff]
    %v347 = vld [vmem:[#allocation5 + $0x6d0] sm:$0xff]
    %v348 = vld [vmem:[#allocation5 + $0x6d8] sm:$0xff]
    %v349 = vld [vmem:[#allocation5 + $0x6e0] sm:$0xf]
    %v350 = vld [vmem:[#allocation5 + $0x6e4] sm:$0xff]
    %v351 = vld [vmem:[#allocation5 + $0x6ec] sm:$0xff]
    %v352 = vld [vmem:[#allocation5 + $0x6f4] sm:$0xff]
    %v353 = vld [vmem:[#allocation5 + $0x6fc] sm:$0xf]
    %v354 = vld [vmem:[#allocation5 + $0x700] sm:$0xff]
    %v355 = vld [vmem:[#allocation5 + $0x708] sm:$0xff]
    %v356 = vld [vmem:[#allocation5 + $0x710] sm:$0xff]
    %v357 = vld [vmem:[#allocation5 + $0x718] sm:$0xf]
    %v358 = vld [vmem:[#allocation5 + $0x71c] sm:$0xff]
    %v359 = vld [vmem:[#allocation5 + $0x724] sm:$0xff]
    %v360 = vld [vmem:[#allocation5 + $0x72c] sm:$0xff]
    %v361 = vld [vmem:[#allocation5 + $0x734] sm:$0xf]
    %v362 = vld [vmem:[#allocation5 + $0x738] sm:$0xff]
    %v363 = vld [vmem:[#allocation5 + $0x740] sm:$0xff]
    %v364 = vld [vmem:[#allocation5 + $0x748] sm:$0xff]
    %v365 = vld [vmem:[#allocation5 + $0x750] sm:$0xf]
    %v366 = vld [vmem:[#allocation5 + $0x754] sm:$0xff]
    %v367 = vld [vmem:[#allocation5 + $0x75c] sm:$0xff]
    %v368 = vld [vmem:[#allocation5 + $0x764] sm:$0xff]
    %v369 = vld [vmem:[#allocation5 + $0x76c] sm:$0xf]
    %v370 = vld [vmem:[#allocation5 + $0x770] sm:$0xff]
    %v371 = vld [vmem:[#allocation5 + $0x778] sm:$0xff]
    %v372 = vld [vmem:[#allocation5 + $0x780] sm:$0xff]
    %v373 = vld [vmem:[#allocation5 + $0x788] sm:$0xf]
    %v374 = vld [vmem:[#allocation5 + $0x78c] sm:$0xff]
    %v375 = vld [vmem:[#allocation5 + $0x794] sm:$0xff]
    %v376 = vld [vmem:[#allocation5 + $0x79c] sm:$0xff]
    %v377 = vld [vmem:[#allocation5 + $0x7a4] sm:$0xf]
    %v378 = vld [vmem:[#allocation5 + $0x7a8] sm:$0xff]
    %v379 = vld [vmem:[#allocation5 + $0x7b0] sm:$0xff]
    %v380 = vld [vmem:[#allocation5 + $0x7b8] sm:$0xff]
    %v381 = vld [vmem:[#allocation5 + $0x7c0] sm:$0xf]
    %v382 = vld [vmem:[#allocation5 + $0x7c4] sm:$0xff]
    %v383 = vld [vmem:[#allocation5 + $0x7cc] sm:$0xff]
    %v384 = vld [vmem:[#allocation5 + $0x7d4] sm:$0xff]
    %v385 = vld [vmem:[#allocation5 + $0x7dc] sm:$0xf]
    %v386 = vld [vmem:[#allocation5 + $0x7e0] sm:$0xff]
    %v387 = vld [vmem:[#allocation5 + $0x7e8] sm:$0xff]
    %v388 = vld [vmem:[#allocation5 + $0x7f0] sm:$0xff]
    %v389 = vld [vmem:[#allocation5 + $0x7f8] sm:$0xf]
    %v390 = vld [vmem:[#allocation5 + $0x7fc] sm:$0xff]
    %v391 = vld [vmem:[#allocation5 + $0x804] sm:$0xff]
    %v392 = vld [vmem:[#allocation5 + $0x80c] sm:$0xff]
    %v393 = vld [vmem:[#allocation5 + $0x814] sm:$0xf]
    %v394 = vld [vmem:[#allocation5 + $0x818] sm:$0xff]
    %v395 = vld [vmem:[#allocation5 + $0x820] sm:$0xff]
    %v396 = vld [vmem:[#allocation5 + $0x828] sm:$0xff]
    %v397 = vld [vmem:[#allocation5 + $0x830] sm:$0xf]
    %v398 = vld [vmem:[#allocation5 + $0x834] sm:$0xff]
    %v399 = vld [vmem:[#allocation5 + $0x83c] sm:$0xff]
    %v400 = vld [vmem:[#allocation5 + $0x844] sm:$0xff]
    %v401 = vld [vmem:[#allocation5 + $0x84c] sm:$0xf]
    %v402 = vld [vmem:[#allocation5 + $0x850] sm:$0xff]
    %v403 = vld [vmem:[#allocation5 + $0x858] sm:$0xff]
    %v404 = vld [vmem:[#allocation5 + $0x860] sm:$0xff]
    %v405 = vld [vmem:[#allocation5 + $0x868] sm:$0xf]
    %v406 = vld [vmem:[#allocation5 + $0x86c] sm:$0xff]
    %v407 = vld [vmem:[#allocation5 + $0x874] sm:$0xff]
    %v408 = vld [vmem:[#allocation5 + $0x87c] sm:$0xff]
    %v409 = vld [vmem:[#allocation5 + $0x884] sm:$0xf]
    %v410 = vld [vmem:[#allocation5 + $0x888] sm:$0xff]
    %v411 = vld [vmem:[#allocation5 + $0x890] sm:$0xff]
    %v412 = vld [vmem:[#allocation5 + $0x898] sm:$0xff]
    %v413 = vld [vmem:[#allocation5 + $0x8a0] sm:$0xf]
    %v414 = vld [vmem:[#allocation5 + $0x8a4] sm:$0xff]
    %v415 = vld [vmem:[#allocation5 + $0x8ac] sm:$0xff]
    %v416 = vld [vmem:[#allocation5 + $0x8b4] sm:$0xff]
    %v417 = vld [vmem:[#allocation5 + $0x8bc] sm:$0xf]
    %v418 = vld [vmem:[#allocation5 + $0x8c0] sm:$0xff]
    %v419 = vld [vmem:[#allocation5 + $0x8c8] sm:$0xff]
    %v420 = vld [vmem:[#allocation5 + $0x8d0] sm:$0xff]
    %v421 = vld [vmem:[#allocation5 + $0x8d8] sm:$0xf]
    %v422 = vld [vmem:[#allocation5 + $0x8dc] sm:$0xff]
    %v423 = vld [vmem:[#allocation5 + $0x8e4] sm:$0xff]
    %v424 = vld [vmem:[#allocation5 + $0x8ec] sm:$0xff]
    %v425 = vld [vmem:[#allocation5 + $0x8f4] sm:$0xf]
    %v426 = vld [vmem:[#allocation5 + $0x8f8] sm:$0xff]
    %v427 = vld [vmem:[#allocation5 + $0x900] sm:$0xff]
    %v428 = vld [vmem:[#allocation5 + $0x908] sm:$0xff]
    %v429 = vld [vmem:[#allocation5 + $0x910] sm:$0xf]
    %v430 = vld [vmem:[#allocation5 + $0x914] sm:$0xff]
    %v431 = vld [vmem:[#allocation5 + $0x91c] sm:$0xff]
    %v432 = vld [vmem:[#allocation5 + $0x924] sm:$0xff]
    %v433 = vld [vmem:[#allocation5 + $0x92c] sm:$0xf]
    %v434 = vld [vmem:[#allocation5 + $0x930] sm:$0xff]
    %v435 = vld [vmem:[#allocation5 + $0x938] sm:$0xff]
    %v436 = vld [vmem:[#allocation5 + $0x940] sm:$0xff]
    %v437 = vld [vmem:[#allocation5 + $0x948] sm:$0xf]
    %v438 = vld [vmem:[#allocation5 + $0x94c] sm:$0xff]
    %v439 = vld [vmem:[#allocation5 + $0x954] sm:$0xff]
    %v440 = vld [vmem:[#allocation5 + $0x95c] sm:$0xff]
    %v441 = vld [vmem:[#allocation5 + $0x964] sm:$0xf]
    %v442 = vld [vmem:[#allocation5 + $0x968] sm:$0xff]
    %v443 = vld [vmem:[#allocation5 + $0x970] sm:$0xff]
    %v444 = vld [vmem:[#allocation5 + $0x978] sm:$0xff]
    %v445 = vld [vmem:[#allocation5 + $0x980] sm:$0xf]
    %v446 = vld [vmem:[#allocation5 + $0x984] sm:$0xff]
    %v447 = vld [vmem:[#allocation5 + $0x98c] sm:$0xff]
    %v448 = vld [vmem:[#allocation5 + $0x994] sm:$0xff]
    %v449 = vld [vmem:[#allocation5 + $0x99c] sm:$0xf]
    %v450 = vld [vmem:[#allocation5 + $0x9a0] sm:$0xff]
    %v451 = vld [vmem:[#allocation5 + $0x9a8] sm:$0xff]
    %v452 = vld [vmem:[#allocation5 + $0x9b0] sm:$0xff]
    %v453 = vld [vmem:[#allocation5 + $0x9b8] sm:$0xf]
    %v454 = vld [vmem:[#allocation5 + $0x9bc] sm:$0xff]
    %v455 = vld [vmem:[#allocation5 + $0x9c4] sm:$0xff]
    %v456 = vld [vmem:[#allocation5 + $0x9cc] sm:$0xff]
    %v457 = vld [vmem:[#allocation5 + $0x9d4] sm:$0xf]
    %v458 = vld [vmem:[#allocation5 + $0x9d8] sm:$0xff]
    %v459 = vld [vmem:[#allocation5 + $0x9e0] sm:$0xff]
    %v460 = vld [vmem:[#allocation5 + $0x9e8] sm:$0xff]
    %v461 = vld [vmem:[#allocation5 + $0x9f0] sm:$0xf]
    %v462 = vld [vmem:[#allocation5 + $0x9f4] sm:$0xff]
    %v463 = vld [vmem:[#allocation5 + $0x9fc] sm:$0xff]
    %v464 = vld [vmem:[#allocation5 + $0xa04] sm:$0xff]
    %v465 = vld [vmem:[#allocation5 + $0xa0c] sm:$0xf]
    %v466 = vld [vmem:[#allocation5 + $0xa10] sm:$0xff]
    %v467 = vld [vmem:[#allocation5 + $0xa18] sm:$0xff]
    %v468 = vld [vmem:[#allocation5 + $0xa20] sm:$0xff]
    %v469 = vld [vmem:[#allocation5 + $0xa28] sm:$0xf]
    %v470 = vld [vmem:[#allocation5 + $0xa2c] sm:$0xff]
    %v471 = vld [vmem:[#allocation5 + $0xa34] sm:$0xff]
    %v472 = vld [vmem:[#allocation5 + $0xa3c] sm:$0xff]
    %v473 = vld [vmem:[#allocation5 + $0xa44] sm:$0xf]
    %v474 = vld [vmem:[#allocation5 + $0xa48] sm:$0xff]
    %v475 = vld [vmem:[#allocation5 + $0xa50] sm:$0xff]
    %v476 = vld [vmem:[#allocation5 + $0xa58] sm:$0xff]
    %v477 = vld [vmem:[#allocation5 + $0xa60] sm:$0xf]
    %v478 = vld [vmem:[#allocation5 + $0xa64] sm:$0xff]
    %v479 = vld [vmem:[#allocation5 + $0xa6c] sm:$0xff]
    %v480 = vld [vmem:[#allocation5 + $0xa74] sm:$0xff]
    %v481 = vld [vmem:[#allocation5 + $0xa7c] sm:$0xf]
    %v482 = vld [vmem:[#allocation5 + $0xa80] sm:$0xff]
    %v483 = vld [vmem:[#allocation5 + $0xa88] sm:$0xff]
    %v484 = vld [vmem:[#allocation5 + $0xa90] sm:$0xff]
    %v485 = vld [vmem:[#allocation5 + $0xa98] sm:$0xf]
    %v486 = vld [vmem:[#allocation5 + $0xa9c] sm:$0xff]
    %v487 = vld [vmem:[#allocation5 + $0xaa4] sm:$0xff]
    %v488 = vld [vmem:[#allocation5 + $0xaac] sm:$0xff]
    %v489 = vld [vmem:[#allocation5 + $0xab4] sm:$0xf]
    %v490 = vld [vmem:[#allocation7] sm:$0x7f]
    %v492 = vlaneseq
    %v493 = vshrl.u32 %v492, 7
    %v494 = vsub.s32 0, %v493
    %v495 = vrot.slane %v490, %v494
    %v496 = vlaneseq
    %v497 = vshrl.u32 %v496, 7
    %v498 = vsub.s32 1, %v497
    %v499 = vrot.slane %v490, %v498
    %v500 = vlaneseq
    %v501 = vshrl.u32 %v500, 7
    %v502 = vsub.s32 2, %v501
    %v503 = vrot.slane %v490, %v502
    %v504 = vlaneseq
    %v505 = vshrl.u32 %v504, 7
    %v506 = vsub.s32 3, %v505
    %v507 = vrot.slane %v490, %v506
    %v508 = vlaneseq
    %v509 = vshrl.u32 %v508, 7
    %v510 = vsub.s32 4, %v509
    %v511 = vrot.slane %v490, %v510
    %v512 = vlaneseq
    %v513 = vshrl.u32 %v512, 7
    %v514 = vsub.s32 5, %v513
    %v515 = vrot.slane %v490, %v514
    %v516 = vlaneseq
    %v517 = vshrl.u32 %v516, 7
    %v518 = vsub.s32 6, %v517
    %v519 = vrot.slane %v490, %v518
    %v919 = vunpack.c.l.b16 %v98
    %v920 = vunpack.c.h.b16 %v98
    %v921 = vunpack.c.l.b16 %v99
    %v922 = vunpack.c.h.b16 %v99
    %v923 = vunpack.c.l.b16 %v100
    %v924 = vunpack.c.h.b16 %v100
    %v925 = vunpack.c.l.b16 %v101
    %v926 = vunpack.c.l.b16 %v102
    %v927 = vunpack.c.h.b16 %v102
    %v928 = vunpack.c.l.b16 %v103
    %v929 = vunpack.c.h.b16 %v103
    %v930 = vunpack.c.l.b16 %v104
    %v931 = vunpack.c.h.b16 %v104
    %v932 = vunpack.c.l.b16 %v105
    %v933 = vunpack.c.l.b16 %v106
    %v934 = vunpack.c.h.b16 %v106
    %v935 = vunpack.c.l.b16 %v107
    %v936 = vunpack.c.h.b16 %v107
    %v937 = vunpack.c.l.b16 %v108
    %v938 = vunpack.c.h.b16 %v108
    %v939 = vunpack.c.l.b16 %v109
    %v940 = vunpack.c.l.b16 %v110
    %v941 = vunpack.c.h.b16 %v110
    %v942 = vunpack.c.l.b16 %v111
    %v943 = vunpack.c.h.b16 %v111
    %v944 = vunpack.c.l.b16 %v112
    %v945 = vunpack.c.h.b16 %v112
    %v946 = vunpack.c.l.b16 %v113
    %v947 = vunpack.c.l.b16 %v114
    %v948 = vunpack.c.h.b16 %v114
    %v949 = vunpack.c.l.b16 %v115
    %v950 = vunpack.c.h.b16 %v115
    %v951 = vunpack.c.l.b16 %v116
    %v952 = vunpack.c.h.b16 %v116
    %v953 = vunpack.c.l.b16 %v117
    %v954 = vunpack.c.l.b16 %v118
    %v955 = vunpack.c.h.b16 %v118
    %v956 = vunpack.c.l.b16 %v119
    %v957 = vunpack.c.h.b16 %v119
    %v958 = vunpack.c.l.b16 %v120
    %v959 = vunpack.c.h.b16 %v120
    %v960 = vunpack.c.l.b16 %v121
    %v961 = vunpack.c.l.b16 %v122
    %v962 = vunpack.c.h.b16 %v122
    %v963 = vunpack.c.l.b16 %v123
    %v964 = vunpack.c.h.b16 %v123
    %v965 = vunpack.c.l.b16 %v124
    %v966 = vunpack.c.h.b16 %v124
    %v967 = vunpack.c.l.b16 %v125
    %v968 = vunpack.c.l.b16 %v126
    %v969 = vunpack.c.h.b16 %v126
    %v970 = vunpack.c.l.b16 %v127
    %v971 = vunpack.c.h.b16 %v127
    %v972 = vunpack.c.l.b16 %v128
    %v973 = vunpack.c.h.b16 %v128
    %v974 = vunpack.c.l.b16 %v129
    %v975 = vunpack.c.l.b16 %v130
    %v976 = vunpack.c.h.b16 %v130
    %v977 = vunpack.c.l.b16 %v131
    %v978 = vunpack.c.h.b16 %v131
    %v979 = vunpack.c.l.b16 %v132
    %v980 = vunpack.c.h.b16 %v132
    %v981 = vunpack.c.l.b16 %v133
    %v982 = vunpack.c.l.b16 %v134
    %v983 = vunpack.c.h.b16 %v134
    %v984 = vunpack.c.l.b16 %v135
    %v985 = vunpack.c.h.b16 %v135
    %v986 = vunpack.c.l.b16 %v136
    %v987 = vunpack.c.h.b16 %v136
    %v988 = vunpack.c.l.b16 %v137
    %v989 = vunpack.c.l.b16 %v138
    %v990 = vunpack.c.h.b16 %v138
    %v991 = vunpack.c.l.b16 %v139
    %v992 = vunpack.c.h.b16 %v139
    %v993 = vunpack.c.l.b16 %v140
    %v994 = vunpack.c.h.b16 %v140
    %v995 = vunpack.c.l.b16 %v141
    %v996 = vunpack.c.l.b16 %v142
    %v997 = vunpack.c.h.b16 %v142
    %v998 = vunpack.c.l.b16 %v143
    %v999 = vunpack.c.h.b16 %v143
    %v1000 = vunpack.c.l.b16 %v144
    %v1001 = vunpack.c.h.b16 %v144
    %v1002 = vunpack.c.l.b16 %v145
    %v1003 = vunpack.c.l.b16 %v146
    %v1004 = vunpack.c.h.b16 %v146
    %v1005 = vunpack.c.l.b16 %v147
    %v1006 = vunpack.c.h.b16 %v147
    %v1007 = vunpack.c.l.b16 %v148
    %v1008 = vunpack.c.h.b16 %v148
    %v1009 = vunpack.c.l.b16 %v149
    %v1010 = vunpack.c.l.b16 %v150
    %v1011 = vunpack.c.h.b16 %v150
    %v1012 = vunpack.c.l.b16 %v151
    %v1013 = vunpack.c.h.b16 %v151
    %v1014 = vunpack.c.l.b16 %v152
    %v1015 = vunpack.c.h.b16 %v152
    %v1016 = vunpack.c.l.b16 %v153
    %v1017 = vunpack.c.l.b16 %v154
    %v1018 = vunpack.c.h.b16 %v154
    %v1019 = vunpack.c.l.b16 %v155
    %v1020 = vunpack.c.h.b16 %v155
    %v1021 = vunpack.c.l.b16 %v156
    %v1022 = vunpack.c.h.b16 %v156
    %v1023 = vunpack.c.l.b16 %v157
    %v1024 = vunpack.c.l.b16 %v158
    %v1025 = vunpack.c.h.b16 %v158
    %v1026 = vunpack.c.l.b16 %v159
    %v1027 = vunpack.c.h.b16 %v159
    %v1028 = vunpack.c.l.b16 %v160
    %v1029 = vunpack.c.h.b16 %v160
    %v1030 = vunpack.c.l.b16 %v161
    %v1031 = vunpack.c.l.b16 %v162
    %v1032 = vunpack.c.h.b16 %v162
    %v1033 = vunpack.c.l.b16 %v163
    %v1034 = vunpack.c.h.b16 %v163
    %v1035 = vunpack.c.l.b16 %v164
    %v1036 = vunpack.c.h.b16 %v164
    %v1037 = vunpack.c.l.b16 %v165
    %v1038 = vunpack.c.l.b16 %v166
    %v1039 = vunpack.c.h.b16 %v166
    %v1040 = vunpack.c.l.b16 %v167
    %v1041 = vunpack.c.h.b16 %v167
    %v1042 = vunpack.c.l.b16 %v168
    %v1043 = vunpack.c.h.b16 %v168
    %v1044 = vunpack.c.l.b16 %v169
    %v1045 = vunpack.c.l.b16 %v170
    %v1046 = vunpack.c.h.b16 %v170
    %v1047 = vunpack.c.l.b16 %v171
    %v1048 = vunpack.c.h.b16 %v171
    %v1049 = vunpack.c.l.b16 %v172
    %v1050 = vunpack.c.h.b16 %v172
    %v1051 = vunpack.c.l.b16 %v173
    %v1052 = vunpack.c.l.b16 %v174
    %v1053 = vunpack.c.h.b16 %v174
    %v1054 = vunpack.c.l.b16 %v175
    %v1055 = vunpack.c.h.b16 %v175
    %v1056 = vunpack.c.l.b16 %v176
    %v1057 = vunpack.c.h.b16 %v176
    %v1058 = vunpack.c.l.b16 %v177
    %v1059 = vunpack.c.l.b16 %v178
    %v1060 = vunpack.c.h.b16 %v178
    %v1061 = vunpack.c.l.b16 %v179
    %v1062 = vunpack.c.h.b16 %v179
    %v1063 = vunpack.c.l.b16 %v180
    %v1064 = vunpack.c.h.b16 %v180
    %v1065 = vunpack.c.l.b16 %v181
    %v1066 = vunpack.c.l.b16 %v182
    %v1067 = vunpack.c.h.b16 %v182
    %v1068 = vunpack.c.l.b16 %v183
    %v1069 = vunpack.c.h.b16 %v183
    %v1070 = vunpack.c.l.b16 %v184
    %v1071 = vunpack.c.h.b16 %v184
    %v1072 = vunpack.c.l.b16 %v185
    %v1073 = vunpack.c.l.b16 %v186
    %v1074 = vunpack.c.h.b16 %v186
    %v1075 = vunpack.c.l.b16 %v187
    %v1076 = vunpack.c.h.b16 %v187
    %v1077 = vunpack.c.l.b16 %v188
    %v1078 = vunpack.c.h.b16 %v188
    %v1079 = vunpack.c.l.b16 %v189
    %v1080 = vunpack.c.l.b16 %v190
    %v1081 = vunpack.c.h.b16 %v190
    %v1082 = vunpack.c.l.b16 %v191
    %v1083 = vunpack.c.h.b16 %v191
    %v1084 = vunpack.c.l.b16 %v192
    %v1085 = vunpack.c.h.b16 %v192
    %v1086 = vunpack.c.l.b16 %v193
    %v1087 = vunpack.c.l.b16 %v194
    %v1088 = vunpack.c.h.b16 %v194
    %v1089 = vunpack.c.l.b16 %v195
    %v1090 = vunpack.c.h.b16 %v195
    %v1091 = vunpack.c.l.b16 %v196
    %v1092 = vunpack.c.h.b16 %v196
    %v1093 = vunpack.c.l.b16 %v197
    %v1094 = vunpack.c.l.b16 %v198
    %v1095 = vunpack.c.h.b16 %v198
    %v1096 = vunpack.c.l.b16 %v199
    %v1097 = vunpack.c.h.b16 %v199
    %v1098 = vunpack.c.l.b16 %v200
    %v1099 = vunpack.c.h.b16 %v200
    %v1100 = vunpack.c.l.b16 %v201
    %v1101 = vunpack.c.l.b16 %v202
    %v1102 = vunpack.c.h.b16 %v202
    %v1103 = vunpack.c.l.b16 %v203
    %v1104 = vunpack.c.h.b16 %v203
    %v1105 = vunpack.c.l.b16 %v204
    %v1106 = vunpack.c.h.b16 %v204
    %v1107 = vunpack.c.l.b16 %v205
    %v1108 = vunpack.c.l.b16 %v206
    %v1109 = vunpack.c.h.b16 %v206
    %v1110 = vunpack.c.l.b16 %v207
    %v1111 = vunpack.c.h.b16 %v207
    %v1112 = vunpack.c.l.b16 %v208
    %v1113 = vunpack.c.h.b16 %v208
    %v1114 = vunpack.c.l.b16 %v209
    %v1115 = vunpack.c.l.b16 %v210
    %v1116 = vunpack.c.h.b16 %v210
    %v1117 = vunpack.c.l.b16 %v211
    %v1118 = vunpack.c.h.b16 %v211
    %v1119 = vunpack.c.l.b16 %v212
    %v1120 = vunpack.c.h.b16 %v212
    %v1121 = vunpack.c.l.b16 %v213
    %v1122 = vunpack.c.l.b16 %v214
    %v1123 = vunpack.c.h.b16 %v214
    %v1124 = vunpack.c.l.b16 %v215
    %v1125 = vunpack.c.h.b16 %v215
    %v1126 = vunpack.c.l.b16 %v216
    %v1127 = vunpack.c.h.b16 %v216
    %v1128 = vunpack.c.l.b16 %v217
    %v1129 = vunpack.c.l.b16 %v218
    %v1130 = vunpack.c.h.b16 %v218
    %v1131 = vunpack.c.l.b16 %v219
    %v1132 = vunpack.c.h.b16 %v219
    %v1133 = vunpack.c.l.b16 %v220
    %v1134 = vunpack.c.h.b16 %v220
    %v1135 = vunpack.c.l.b16 %v221
    %v1136 = vunpack.c.l.b16 %v222
    %v1137 = vunpack.c.h.b16 %v222
    %v1138 = vunpack.c.l.b16 %v223
    %v1139 = vunpack.c.h.b16 %v223
    %v1140 = vunpack.c.l.b16 %v224
    %v1141 = vunpack.c.h.b16 %v224
    %v1142 = vunpack.c.l.b16 %v225
    %v1143 = vunpack.c.l.b16 %v226
    %v1144 = vunpack.c.h.b16 %v226
    %v1145 = vunpack.c.l.b16 %v227
    %v1146 = vunpack.c.h.b16 %v227
    %v1147 = vunpack.c.l.b16 %v228
    %v1148 = vunpack.c.h.b16 %v228
    %v1149 = vunpack.c.l.b16 %v229
    %v1150 = vunpack.c.l.b16 %v230
    %v1151 = vunpack.c.h.b16 %v230
    %v1152 = vunpack.c.l.b16 %v231
    %v1153 = vunpack.c.h.b16 %v231
    %v1154 = vunpack.c.l.b16 %v232
    %v1155 = vunpack.c.h.b16 %v232
    %v1156 = vunpack.c.l.b16 %v233
    %v1157 = vunpack.c.l.b16 %v234
    %v1158 = vunpack.c.h.b16 %v234
    %v1159 = vunpack.c.l.b16 %v235
    %v1160 = vunpack.c.h.b16 %v235
    %v1161 = vunpack.c.l.b16 %v236
    %v1162 = vunpack.c.h.b16 %v236
    %v1163 = vunpack.c.l.b16 %v237
    %v1164 = vunpack.c.l.b16 %v238
    %v1165 = vunpack.c.h.b16 %v238
    %v1166 = vunpack.c.l.b16 %v239
    %v1167 = vunpack.c.h.b16 %v239
    %v1168 = vunpack.c.l.b16 %v240
    %v1169 = vunpack.c.h.b16 %v240
    %v1170 = vunpack.c.l.b16 %v241
    %v1171 = vunpack.c.l.b16 %v242
    %v1172 = vunpack.c.h.b16 %v242
    %v1173 = vunpack.c.l.b16 %v243
    %v1174 = vunpack.c.h.b16 %v243
    %v1175 = vunpack.c.l.b16 %v244
    %v1176 = vunpack.c.h.b16 %v244
    %v1177 = vunpack.c.l.b16 %v245
    %v1178 = vunpack.c.l.b16 %v246
    %v1179 = vunpack.c.h.b16 %v246
    %v1180 = vunpack.c.l.b16 %v247
    %v1181 = vunpack.c.h.b16 %v247
    %v1182 = vunpack.c.l.b16 %v248
    %v1183 = vunpack.c.h.b16 %v248
    %v1184 = vunpack.c.l.b16 %v249
    %v1185 = vunpack.c.l.b16 %v250
    %v1186 = vunpack.c.h.b16 %v250
    %v1187 = vunpack.c.l.b16 %v251
    %v1188 = vunpack.c.h.b16 %v251
    %v1189 = vunpack.c.l.b16 %v252
    %v1190 = vunpack.c.h.b16 %v252
    %v1191 = vunpack.c.l.b16 %v253
    %v1192 = vunpack.c.l.b16 %v254
    %v1193 = vunpack.c.h.b16 %v254
    %v1194 = vunpack.c.l.b16 %v255
    %v1195 = vunpack.c.h.b16 %v255
    %v1196 = vunpack.c.l.b16 %v256
    %v1197 = vunpack.c.h.b16 %v256
    %v1198 = vunpack.c.l.b16 %v257
    %v1199 = vunpack.c.l.b16 %v258
    %v1200 = vunpack.c.h.b16 %v258
    %v1201 = vunpack.c.l.b16 %v259
    %v1202 = vunpack.c.h.b16 %v259
    %v1203 = vunpack.c.l.b16 %v260
    %v1204 = vunpack.c.h.b16 %v260
    %v1205 = vunpack.c.l.b16 %v261
    %v1206 = vunpack.c.l.b16 %v262
    %v1207 = vunpack.c.h.b16 %v262
    %v1208 = vunpack.c.l.b16 %v263
    %v1209 = vunpack.c.h.b16 %v263
    %v1210 = vunpack.c.l.b16 %v264
    %v1211 = vunpack.c.h.b16 %v264
    %v1212 = vunpack.c.l.b16 %v265
    %v1213 = vunpack.c.l.b16 %v266
    %v1214 = vunpack.c.h.b16 %v266
    %v1215 = vunpack.c.l.b16 %v267
    %v1216 = vunpack.c.h.b16 %v267
    %v1217 = vunpack.c.l.b16 %v268
    %v1218 = vunpack.c.h.b16 %v268
    %v1219 = vunpack.c.l.b16 %v269
    %v1220 = vunpack.c.l.b16 %v270
    %v1221 = vunpack.c.h.b16 %v270
    %v1222 = vunpack.c.l.b16 %v271
    %v1223 = vunpack.c.h.b16 %v271
    %v1224 = vunpack.c.l.b16 %v272
    %v1225 = vunpack.c.h.b16 %v272
    %v1226 = vunpack.c.l.b16 %v273
    %v1227 = vunpack.c.l.b16 %v274
    %v1228 = vunpack.c.h.b16 %v274
    %v1229 = vunpack.c.l.b16 %v275
    %v1230 = vunpack.c.h.b16 %v275
    %v1231 = vunpack.c.l.b16 %v276
    %v1232 = vunpack.c.h.b16 %v276
    %v1233 = vunpack.c.l.b16 %v277
    %v1234 = vunpack.c.l.b16 %v278
    %v1235 = vunpack.c.h.b16 %v278
    %v1236 = vunpack.c.l.b16 %v279
    %v1237 = vunpack.c.h.b16 %v279
    %v1238 = vunpack.c.l.b16 %v280
    %v1239 = vunpack.c.h.b16 %v280
    %v1240 = vunpack.c.l.b16 %v281
    %v1241 = vunpack.c.l.b16 %v282
    %v1242 = vunpack.c.h.b16 %v282
    %v1243 = vunpack.c.l.b16 %v283
    %v1244 = vunpack.c.h.b16 %v283
    %v1245 = vunpack.c.l.b16 %v284
    %v1246 = vunpack.c.h.b16 %v284
    %v1247 = vunpack.c.l.b16 %v285
    %v1248 = vunpack.c.l.b16 %v286
    %v1249 = vunpack.c.h.b16 %v286
    %v1250 = vunpack.c.l.b16 %v287
    %v1251 = vunpack.c.h.b16 %v287
    %v1252 = vunpack.c.l.b16 %v288
    %v1253 = vunpack.c.h.b16 %v288
    %v1254 = vunpack.c.l.b16 %v289
    %v1255 = vunpack.c.l.b16 %v290
    %v1256 = vunpack.c.h.b16 %v290
    %v1257 = vunpack.c.l.b16 %v291
    %v1258 = vunpack.c.h.b16 %v291
    %v1259 = vunpack.c.l.b16 %v292
    %v1260 = vunpack.c.h.b16 %v292
    %v1261 = vunpack.c.l.b16 %v293
    %v1262 = vunpack.c.l.b16 %v294
    %v1263 = vunpack.c.h.b16 %v294
    %v1264 = vunpack.c.l.b16 %v295
    %v1265 = vunpack.c.h.b16 %v295
    %v1266 = vunpack.c.l.b16 %v296
    %v1267 = vunpack.c.h.b16 %v296
    %v1268 = vunpack.c.l.b16 %v297
    %v1269 = vunpack.c.l.b16 %v298
    %v1270 = vunpack.c.h.b16 %v298
    %v1271 = vunpack.c.l.b16 %v299
    %v1272 = vunpack.c.h.b16 %v299
    %v1273 = vunpack.c.l.b16 %v300
    %v1274 = vunpack.c.h.b16 %v300
    %v1275 = vunpack.c.l.b16 %v301
    %v1276 = vunpack.c.l.b16 %v302
    %v1277 = vunpack.c.h.b16 %v302
    %v1278 = vunpack.c.l.b16 %v303
    %v1279 = vunpack.c.h.b16 %v303
    %v1280 = vunpack.c.l.b16 %v304
    %v1281 = vunpack.c.h.b16 %v304
    %v1282 = vunpack.c.l.b16 %v305
    %v1283 = vunpack.c.l.b16 %v306
    %v1284 = vunpack.c.h.b16 %v306
    %v1285 = vunpack.c.l.b16 %v307
    %v1286 = vunpack.c.h.b16 %v307
    %v1287 = vunpack.c.l.b16 %v308
    %v1288 = vunpack.c.h.b16 %v308
    %v1289 = vunpack.c.l.b16 %v309
    %v1290 = vunpack.c.l.b16 %v310
    %v1291 = vunpack.c.h.b16 %v310
    %v1292 = vunpack.c.l.b16 %v311
    %v1293 = vunpack.c.h.b16 %v311
    %v1294 = vunpack.c.l.b16 %v312
    %v1295 = vunpack.c.h.b16 %v312
    %v1296 = vunpack.c.l.b16 %v313
    %v1297 = vunpack.c.l.b16 %v314
    %v1298 = vunpack.c.h.b16 %v314
    %v1299 = vunpack.c.l.b16 %v315
    %v1300 = vunpack.c.h.b16 %v315
    %v1301 = vunpack.c.l.b16 %v316
    %v1302 = vunpack.c.h.b16 %v316
    %v1303 = vunpack.c.l.b16 %v317
    %v1304 = vunpack.c.l.b16 %v318
    %v1305 = vunpack.c.h.b16 %v318
    %v1306 = vunpack.c.l.b16 %v319
    %v1307 = vunpack.c.h.b16 %v319
    %v1308 = vunpack.c.l.b16 %v320
    %v1309 = vunpack.c.h.b16 %v320
    %v1310 = vunpack.c.l.b16 %v321
    %v1311 = vunpack.c.l.b16 %v322
    %v1312 = vunpack.c.h.b16 %v322
    %v1313 = vunpack.c.l.b16 %v323
    %v1314 = vunpack.c.h.b16 %v323
    %v1315 = vunpack.c.l.b16 %v324
    %v1316 = vunpack.c.h.b16 %v324
    %v1317 = vunpack.c.l.b16 %v325
    %v1318 = vunpack.c.l.b16 %v326
    %v1319 = vunpack.c.h.b16 %v326
    %v1320 = vunpack.c.l.b16 %v327
    %v1321 = vunpack.c.h.b16 %v327
    %v1322 = vunpack.c.l.b16 %v328
    %v1323 = vunpack.c.h.b16 %v328
    %v1324 = vunpack.c.l.b16 %v329
    %v1325 = vunpack.c.l.b16 %v330
    %v1326 = vunpack.c.h.b16 %v330
    %v1327 = vunpack.c.l.b16 %v331
    %v1328 = vunpack.c.h.b16 %v331
    %v1329 = vunpack.c.l.b16 %v332
    %v1330 = vunpack.c.h.b16 %v332
    %v1331 = vunpack.c.l.b16 %v333
    %v1332 = vunpack.c.l.b16 %v334
    %v1333 = vunpack.c.h.b16 %v334
    %v1334 = vunpack.c.l.b16 %v335
    %v1335 = vunpack.c.h.b16 %v335
    %v1336 = vunpack.c.l.b16 %v336
    %v1337 = vunpack.c.h.b16 %v336
    %v1338 = vunpack.c.l.b16 %v337
    %v1339 = vunpack.c.l.b16 %v338
    %v1340 = vunpack.c.h.b16 %v338
    %v1341 = vunpack.c.l.b16 %v339
    %v1342 = vunpack.c.h.b16 %v339
    %v1343 = vunpack.c.l.b16 %v340
    %v1344 = vunpack.c.h.b16 %v340
    %v1345 = vunpack.c.l.b16 %v341
    %v1346 = vunpack.c.l.b16 %v342
    %v1347 = vunpack.c.h.b16 %v342
    %v1348 = vunpack.c.l.b16 %v343
    %v1349 = vunpack.c.h.b16 %v343
    %v1350 = vunpack.c.l.b16 %v344
    %v1351 = vunpack.c.h.b16 %v344
    %v1352 = vunpack.c.l.b16 %v345
    %v1353 = vunpack.c.l.b16 %v346
    %v1354 = vunpack.c.h.b16 %v346
    %v1355 = vunpack.c.l.b16 %v347
    %v1356 = vunpack.c.h.b16 %v347
    %v1357 = vunpack.c.l.b16 %v348
    %v1358 = vunpack.c.h.b16 %v348
    %v1359 = vunpack.c.l.b16 %v349
    %v1360 = vunpack.c.l.b16 %v350
    %v1361 = vunpack.c.h.b16 %v350
    %v1362 = vunpack.c.l.b16 %v351
    %v1363 = vunpack.c.h.b16 %v351
    %v1364 = vunpack.c.l.b16 %v352
    %v1365 = vunpack.c.h.b16 %v352
    %v1366 = vunpack.c.l.b16 %v353
    %v1367 = vunpack.c.l.b16 %v354
    %v1368 = vunpack.c.h.b16 %v354
    %v1369 = vunpack.c.l.b16 %v355
    %v1370 = vunpack.c.h.b16 %v355
    %v1371 = vunpack.c.l.b16 %v356
    %v1372 = vunpack.c.h.b16 %v356
    %v1373 = vunpack.c.l.b16 %v357
    %v1374 = vunpack.c.l.b16 %v358
    %v1375 = vunpack.c.h.b16 %v358
    %v1376 = vunpack.c.l.b16 %v359
    %v1377 = vunpack.c.h.b16 %v359
    %v1378 = vunpack.c.l.b16 %v360
    %v1379 = vunpack.c.h.b16 %v360
    %v1380 = vunpack.c.l.b16 %v361
    %v1381 = vunpack.c.l.b16 %v362
    %v1382 = vunpack.c.h.b16 %v362
    %v1383 = vunpack.c.l.b16 %v363
    %v1384 = vunpack.c.h.b16 %v363
    %v1385 = vunpack.c.l.b16 %v364
    %v1386 = vunpack.c.h.b16 %v364
    %v1387 = vunpack.c.l.b16 %v365
    %v1388 = vunpack.c.l.b16 %v366
    %v1389 = vunpack.c.h.b16 %v366
    %v1390 = vunpack.c.l.b16 %v367
    %v1391 = vunpack.c.h.b16 %v367
    %v1392 = vunpack.c.l.b16 %v368
    %v1393 = vunpack.c.h.b16 %v368
    %v1394 = vunpack.c.l.b16 %v369
    %v1395 = vunpack.c.l.b16 %v370
    %v1396 = vunpack.c.h.b16 %v370
    %v1397 = vunpack.c.l.b16 %v371
    %v1398 = vunpack.c.h.b16 %v371
    %v1399 = vunpack.c.l.b16 %v372
    %v1400 = vunpack.c.h.b16 %v372
    %v1401 = vunpack.c.l.b16 %v373
    %v1402 = vunpack.c.l.b16 %v374
    %v1403 = vunpack.c.h.b16 %v374
    %v1404 = vunpack.c.l.b16 %v375
    %v1405 = vunpack.c.h.b16 %v375
    %v1406 = vunpack.c.l.b16 %v376
    %v1407 = vunpack.c.h.b16 %v376
    %v1408 = vunpack.c.l.b16 %v377
    %v1409 = vunpack.c.l.b16 %v378
    %v1410 = vunpack.c.h.b16 %v378
    %v1411 = vunpack.c.l.b16 %v379
    %v1412 = vunpack.c.h.b16 %v379
    %v1413 = vunpack.c.l.b16 %v380
    %v1414 = vunpack.c.h.b16 %v380
    %v1415 = vunpack.c.l.b16 %v381
    %v1416 = vunpack.c.l.b16 %v382
    %v1417 = vunpack.c.h.b16 %v382
    %v1418 = vunpack.c.l.b16 %v383
    %v1419 = vunpack.c.h.b16 %v383
    %v1420 = vunpack.c.l.b16 %v384
    %v1421 = vunpack.c.h.b16 %v384
    %v1422 = vunpack.c.l.b16 %v385
    %v1423 = vunpack.c.l.b16 %v386
    %v1424 = vunpack.c.h.b16 %v386
    %v1425 = vunpack.c.l.b16 %v387
    %v1426 = vunpack.c.h.b16 %v387
    %v1427 = vunpack.c.l.b16 %v388
    %v1428 = vunpack.c.h.b16 %v388
    %v1429 = vunpack.c.l.b16 %v389
    %v1430 = vunpack.c.l.b16 %v390
    %v1431 = vunpack.c.h.b16 %v390
    %v1432 = vunpack.c.l.b16 %v391
    %v1433 = vunpack.c.h.b16 %v391
    %v1434 = vunpack.c.l.b16 %v392
    %v1435 = vunpack.c.h.b16 %v392
    %v1436 = vunpack.c.l.b16 %v393
    %v1437 = vunpack.c.l.b16 %v394
    %v1438 = vunpack.c.h.b16 %v394
    %v1439 = vunpack.c.l.b16 %v395
    %v1440 = vunpack.c.h.b16 %v395
    %v1441 = vunpack.c.l.b16 %v396
    %v1442 = vunpack.c.h.b16 %v396
    %v1443 = vunpack.c.l.b16 %v397
    %v1444 = vunpack.c.l.b16 %v398
    %v1445 = vunpack.c.h.b16 %v398
    %v1446 = vunpack.c.l.b16 %v399
    %v1447 = vunpack.c.h.b16 %v399
    %v1448 = vunpack.c.l.b16 %v400
    %v1449 = vunpack.c.h.b16 %v400
    %v1450 = vunpack.c.l.b16 %v401
    %v1451 = vunpack.c.l.b16 %v402
    %v1452 = vunpack.c.h.b16 %v402
    %v1453 = vunpack.c.l.b16 %v403
    %v1454 = vunpack.c.h.b16 %v403
    %v1455 = vunpack.c.l.b16 %v404
    %v1456 = vunpack.c.h.b16 %v404
    %v1457 = vunpack.c.l.b16 %v405
    %v1458 = vunpack.c.l.b16 %v406
    %v1459 = vunpack.c.h.b16 %v406
    %v1460 = vunpack.c.l.b16 %v407
    %v1461 = vunpack.c.h.b16 %v407
    %v1462 = vunpack.c.l.b16 %v408
    %v1463 = vunpack.c.h.b16 %v408
    %v1464 = vunpack.c.l.b16 %v409
    %v1465 = vunpack.c.l.b16 %v410
    %v1466 = vunpack.c.h.b16 %v410
    %v1467 = vunpack.c.l.b16 %v411
    %v1468 = vunpack.c.h.b16 %v411
    %v1469 = vunpack.c.l.b16 %v412
    %v1470 = vunpack.c.h.b16 %v412
    %v1471 = vunpack.c.l.b16 %v413
    %v1472 = vunpack.c.l.b16 %v414
    %v1473 = vunpack.c.h.b16 %v414
    %v1474 = vunpack.c.l.b16 %v415
    %v1475 = vunpack.c.h.b16 %v415
    %v1476 = vunpack.c.l.b16 %v416
    %v1477 = vunpack.c.h.b16 %v416
    %v1478 = vunpack.c.l.b16 %v417
    %v1479 = vunpack.c.l.b16 %v418
    %v1480 = vunpack.c.h.b16 %v418
    %v1481 = vunpack.c.l.b16 %v419
    %v1482 = vunpack.c.h.b16 %v419
    %v1483 = vunpack.c.l.b16 %v420
    %v1484 = vunpack.c.h.b16 %v420
    %v1485 = vunpack.c.l.b16 %v421
    %v1486 = vunpack.c.l.b16 %v422
    %v1487 = vunpack.c.h.b16 %v422
    %v1488 = vunpack.c.l.b16 %v423
    %v1489 = vunpack.c.h.b16 %v423
    %v1490 = vunpack.c.l.b16 %v424
    %v1491 = vunpack.c.h.b16 %v424
    %v1492 = vunpack.c.l.b16 %v425
    %v1493 = vunpack.c.l.b16 %v426
    %v1494 = vunpack.c.h.b16 %v426
    %v1495 = vunpack.c.l.b16 %v427
    %v1496 = vunpack.c.h.b16 %v427
    %v1497 = vunpack.c.l.b16 %v428
    %v1498 = vunpack.c.h.b16 %v428
    %v1499 = vunpack.c.l.b16 %v429
    %v1500 = vunpack.c.l.b16 %v430
    %v1501 = vunpack.c.h.b16 %v430
    %v1502 = vunpack.c.l.b16 %v431
    %v1503 = vunpack.c.h.b16 %v431
    %v1504 = vunpack.c.l.b16 %v432
    %v1505 = vunpack.c.h.b16 %v432
    %v1506 = vunpack.c.l.b16 %v433
    %v1507 = vunpack.c.l.b16 %v434
    %v1508 = vunpack.c.h.b16 %v434
    %v1509 = vunpack.c.l.b16 %v435
    %v1510 = vunpack.c.h.b16 %v435
    %v1511 = vunpack.c.l.b16 %v436
    %v1512 = vunpack.c.h.b16 %v436
    %v1513 = vunpack.c.l.b16 %v437
    %v1514 = vunpack.c.l.b16 %v438
    %v1515 = vunpack.c.h.b16 %v438
    %v1516 = vunpack.c.l.b16 %v439
    %v1517 = vunpack.c.h.b16 %v439
    %v1518 = vunpack.c.l.b16 %v440
    %v1519 = vunpack.c.h.b16 %v440
    %v1520 = vunpack.c.l.b16 %v441
    %v1521 = vunpack.c.l.b16 %v442
    %v1522 = vunpack.c.h.b16 %v442
    %v1523 = vunpack.c.l.b16 %v443
    %v1524 = vunpack.c.h.b16 %v443
    %v1525 = vunpack.c.l.b16 %v444
    %v1526 = vunpack.c.h.b16 %v444
    %v1527 = vunpack.c.l.b16 %v445
    %v1528 = vunpack.c.l.b16 %v446
    %v1529 = vunpack.c.h.b16 %v446
    %v1530 = vunpack.c.l.b16 %v447
    %v1531 = vunpack.c.h.b16 %v447
    %v1532 = vunpack.c.l.b16 %v448
    %v1533 = vunpack.c.h.b16 %v448
    %v1534 = vunpack.c.l.b16 %v449
    %v1535 = vunpack.c.l.b16 %v450
    %v1536 = vunpack.c.h.b16 %v450
    %v1537 = vunpack.c.l.b16 %v451
    %v1538 = vunpack.c.h.b16 %v451
    %v1539 = vunpack.c.l.b16 %v452
    %v1540 = vunpack.c.h.b16 %v452
    %v1541 = vunpack.c.l.b16 %v453
    %v1542 = vunpack.c.l.b16 %v454
    %v1543 = vunpack.c.h.b16 %v454
    %v1544 = vunpack.c.l.b16 %v455
    %v1545 = vunpack.c.h.b16 %v455
    %v1546 = vunpack.c.l.b16 %v456
    %v1547 = vunpack.c.h.b16 %v456
    %v1548 = vunpack.c.l.b16 %v457
    %v1549 = vunpack.c.l.b16 %v458
    %v1550 = vunpack.c.h.b16 %v458
    %v1551 = vunpack.c.l.b16 %v459
    %v1552 = vunpack.c.h.b16 %v459
    %v1553 = vunpack.c.l.b16 %v460
    %v1554 = vunpack.c.h.b16 %v460
    %v1555 = vunpack.c.l.b16 %v461
    %v1556 = vunpack.c.l.b16 %v462
    %v1557 = vunpack.c.h.b16 %v462
    %v1558 = vunpack.c.l.b16 %v463
    %v1559 = vunpack.c.h.b16 %v463
    %v1560 = vunpack.c.l.b16 %v464
    %v1561 = vunpack.c.h.b16 %v464
    %v1562 = vunpack.c.l.b16 %v465
    %v1563 = vunpack.c.l.b16 %v466
    %v1564 = vunpack.c.h.b16 %v466
    %v1565 = vunpack.c.l.b16 %v467
    %v1566 = vunpack.c.h.b16 %v467
    %v1567 = vunpack.c.l.b16 %v468
    %v1568 = vunpack.c.h.b16 %v468
    %v1569 = vunpack.c.l.b16 %v469
    %v1570 = vunpack.c.l.b16 %v470
    %v1571 = vunpack.c.h.b16 %v470
    %v1572 = vunpack.c.l.b16 %v471
    %v1573 = vunpack.c.h.b16 %v471
    %v1574 = vunpack.c.l.b16 %v472
    %v1575 = vunpack.c.h.b16 %v472
    %v1576 = vunpack.c.l.b16 %v473
    %v1577 = vunpack.c.l.b16 %v474
    %v1578 = vunpack.c.h.b16 %v474
    %v1579 = vunpack.c.l.b16 %v475
    %v1580 = vunpack.c.h.b16 %v475
    %v1581 = vunpack.c.l.b16 %v476
    %v1582 = vunpack.c.h.b16 %v476
    %v1583 = vunpack.c.l.b16 %v477
    %v1584 = vunpack.c.l.b16 %v478
    %v1585 = vunpack.c.h.b16 %v478
    %v1586 = vunpack.c.l.b16 %v479
    %v1587 = vunpack.c.h.b16 %v479
    %v1588 = vunpack.c.l.b16 %v480
    %v1589 = vunpack.c.h.b16 %v480
    %v1590 = vunpack.c.l.b16 %v481
    %v1591 = vunpack.c.l.b16 %v482
    %v1592 = vunpack.c.h.b16 %v482
    %v1593 = vunpack.c.l.b16 %v483
    %v1594 = vunpack.c.h.b16 %v483
    %v1595 = vunpack.c.l.b16 %v484
    %v1596 = vunpack.c.h.b16 %v484
    %v1597 = vunpack.c.l.b16 %v485
    %v1598 = vunpack.c.l.b16 %v486
    %v1599 = vunpack.c.h.b16 %v486
    %v1600 = vunpack.c.l.b16 %v487
    %v1601 = vunpack.c.h.b16 %v487
    %v1602 = vunpack.c.l.b16 %v488
    %v1603 = vunpack.c.h.b16 %v488
    %v1604 = vunpack.c.l.b16 %v489
    %v1605 = vpack.c.b16 %v926, %v919
    %v1606 = vpack.c.b16 %v927, %v920
    %v1607 = vpack.c.b16 %v928, %v921
    %v1608 = vpack.c.b16 %v929, %v922
    %v1609 = vpack.c.b16 %v930, %v923
    %v1610 = vpack.c.b16 %v931, %v924
    %v1611 = vpack.c.b16 %v932, %v925
    %v1612 = vpack.c.b16 %v940, %v933
    %v1613 = vpack.c.b16 %v941, %v934
    %v1614 = vpack.c.b16 %v942, %v935
    %v1615 = vpack.c.b16 %v943, %v936
    %v1616 = vpack.c.b16 %v944, %v937
    %v1617 = vpack.c.b16 %v945, %v938
    %v1618 = vpack.c.b16 %v946, %v939
    %v1619 = vpack.c.b16 %v954, %v947
    %v1620 = vpack.c.b16 %v955, %v948
    %v1621 = vpack.c.b16 %v956, %v949
    %v1622 = vpack.c.b16 %v957, %v950
    %v1623 = vpack.c.b16 %v958, %v951
    %v1624 = vpack.c.b16 %v959, %v952
    %v1625 = vpack.c.b16 %v960, %v953
    %v1626 = vpack.c.b16 %v968, %v961
    %v1627 = vpack.c.b16 %v969, %v962
    %v1628 = vpack.c.b16 %v970, %v963
    %v1629 = vpack.c.b16 %v971, %v964
    %v1630 = vpack.c.b16 %v972, %v965
    %v1631 = vpack.c.b16 %v973, %v966
    %v1632 = vpack.c.b16 %v974, %v967
    %v1633 = vpack.c.b16 %v982, %v975
    %v1634 = vpack.c.b16 %v983, %v976
    %v1635 = vpack.c.b16 %v984, %v977
    %v1636 = vpack.c.b16 %v985, %v978
    %v1637 = vpack.c.b16 %v986, %v979
    %v1638 = vpack.c.b16 %v987, %v980
    %v1639 = vpack.c.b16 %v988, %v981
    %v1640 = vpack.c.b16 %v996, %v989
    %v1641 = vpack.c.b16 %v997, %v990
    %v1642 = vpack.c.b16 %v998, %v991
    %v1643 = vpack.c.b16 %v999, %v992
    %v1644 = vpack.c.b16 %v1000, %v993
    %v1645 = vpack.c.b16 %v1001, %v994
    %v1646 = vpack.c.b16 %v1002, %v995
    %v1647 = vpack.c.b16 %v1010, %v1003
    %v1648 = vpack.c.b16 %v1011, %v1004
    %v1649 = vpack.c.b16 %v1012, %v1005
    %v1650 = vpack.c.b16 %v1013, %v1006
    %v1651 = vpack.c.b16 %v1014, %v1007
    %v1652 = vpack.c.b16 %v1015, %v1008
    %v1653 = vpack.c.b16 %v1016, %v1009
    %v1654 = vpack.c.b16 %v1024, %v1017
    %v1655 = vpack.c.b16 %v1025, %v1018
    %v1656 = vpack.c.b16 %v1026, %v1019
    %v1657 = vpack.c.b16 %v1027, %v1020
    %v1658 = vpack.c.b16 %v1028, %v1021
    %v1659 = vpack.c.b16 %v1029, %v1022
    %v1660 = vpack.c.b16 %v1030, %v1023
    %v1661 = vpack.c.b16 %v1038, %v1031
    %v1662 = vpack.c.b16 %v1039, %v1032
    %v1663 = vpack.c.b16 %v1040, %v1033
    %v1664 = vpack.c.b16 %v1041, %v1034
    %v1665 = vpack.c.b16 %v1042, %v1035
    %v1666 = vpack.c.b16 %v1043, %v1036
    %v1667 = vpack.c.b16 %v1044, %v1037
    %v1668 = vpack.c.b16 %v1052, %v1045
    %v1669 = vpack.c.b16 %v1053, %v1046
    %v1670 = vpack.c.b16 %v1054, %v1047
    %v1671 = vpack.c.b16 %v1055, %v1048
    %v1672 = vpack.c.b16 %v1056, %v1049
    %v1673 = vpack.c.b16 %v1057, %v1050
    %v1674 = vpack.c.b16 %v1058, %v1051
    %v1675 = vpack.c.b16 %v1066, %v1059
    %v1676 = vpack.c.b16 %v1067, %v1060
    %v1677 = vpack.c.b16 %v1068, %v1061
    %v1678 = vpack.c.b16 %v1069, %v1062
    %v1679 = vpack.c.b16 %v1070, %v1063
    %v1680 = vpack.c.b16 %v1071, %v1064
    %v1681 = vpack.c.b16 %v1072, %v1065
    %v1682 = vpack.c.b16 %v1080, %v1073
    %v1683 = vpack.c.b16 %v1081, %v1074
    %v1684 = vpack.c.b16 %v1082, %v1075
    %v1685 = vpack.c.b16 %v1083, %v1076
    %v1686 = vpack.c.b16 %v1084, %v1077
    %v1687 = vpack.c.b16 %v1085, %v1078
    %v1688 = vpack.c.b16 %v1086, %v1079
    %v1689 = vpack.c.b16 %v1094, %v1087
    %v1690 = vpack.c.b16 %v1095, %v1088
    %v1691 = vpack.c.b16 %v1096, %v1089
    %v1692 = vpack.c.b16 %v1097, %v1090
    %v1693 = vpack.c.b16 %v1098, %v1091
    %v1694 = vpack.c.b16 %v1099, %v1092
    %v1695 = vpack.c.b16 %v1100, %v1093
    %v1696 = vpack.c.b16 %v1108, %v1101
    %v1697 = vpack.c.b16 %v1109, %v1102
    %v1698 = vpack.c.b16 %v1110, %v1103
    %v1699 = vpack.c.b16 %v1111, %v1104
    %v1700 = vpack.c.b16 %v1112, %v1105
    %v1701 = vpack.c.b16 %v1113, %v1106
    %v1702 = vpack.c.b16 %v1114, %v1107
    %v1703 = vpack.c.b16 %v1122, %v1115
    %v1704 = vpack.c.b16 %v1123, %v1116
    %v1705 = vpack.c.b16 %v1124, %v1117
    %v1706 = vpack.c.b16 %v1125, %v1118
    %v1707 = vpack.c.b16 %v1126, %v1119
    %v1708 = vpack.c.b16 %v1127, %v1120
    %v1709 = vpack.c.b16 %v1128, %v1121
    %v1710 = vpack.c.b16 %v1136, %v1129
    %v1711 = vpack.c.b16 %v1137, %v1130
    %v1712 = vpack.c.b16 %v1138, %v1131
    %v1713 = vpack.c.b16 %v1139, %v1132
    %v1714 = vpack.c.b16 %v1140, %v1133
    %v1715 = vpack.c.b16 %v1141, %v1134
    %v1716 = vpack.c.b16 %v1142, %v1135
    %v1717 = vpack.c.b16 %v1150, %v1143
    %v1718 = vpack.c.b16 %v1151, %v1144
    %v1719 = vpack.c.b16 %v1152, %v1145
    %v1720 = vpack.c.b16 %v1153, %v1146
    %v1721 = vpack.c.b16 %v1154, %v1147
    %v1722 = vpack.c.b16 %v1155, %v1148
    %v1723 = vpack.c.b16 %v1156, %v1149
    %v1724 = vpack.c.b16 %v1164, %v1157
    %v1725 = vpack.c.b16 %v1165, %v1158
    %v1726 = vpack.c.b16 %v1166, %v1159
    %v1727 = vpack.c.b16 %v1167, %v1160
    %v1728 = vpack.c.b16 %v1168, %v1161
    %v1729 = vpack.c.b16 %v1169, %v1162
    %v1730 = vpack.c.b16 %v1170, %v1163
    %v1731 = vpack.c.b16 %v1178, %v1171
    %v1732 = vpack.c.b16 %v1179, %v1172
    %v1733 = vpack.c.b16 %v1180, %v1173
    %v1734 = vpack.c.b16 %v1181, %v1174
    %v1735 = vpack.c.b16 %v1182, %v1175
    %v1736 = vpack.c.b16 %v1183, %v1176
    %v1737 = vpack.c.b16 %v1184, %v1177
    %v1738 = vpack.c.b16 %v1192, %v1185
    %v1739 = vpack.c.b16 %v1193, %v1186
    %v1740 = vpack.c.b16 %v1194, %v1187
    %v1741 = vpack.c.b16 %v1195, %v1188
    %v1742 = vpack.c.b16 %v1196, %v1189
    %v1743 = vpack.c.b16 %v1197, %v1190
    %v1744 = vpack.c.b16 %v1198, %v1191
    %v1745 = vpack.c.b16 %v1206, %v1199
    %v1746 = vpack.c.b16 %v1207, %v1200
    %v1747 = vpack.c.b16 %v1208, %v1201
    %v1748 = vpack.c.b16 %v1209, %v1202
    %v1749 = vpack.c.b16 %v1210, %v1203
    %v1750 = vpack.c.b16 %v1211, %v1204
    %v1751 = vpack.c.b16 %v1212, %v1205
    %v1752 = vpack.c.b16 %v1220, %v1213
    %v1753 = vpack.c.b16 %v1221, %v1214
    %v1754 = vpack.c.b16 %v1222, %v1215
    %v1755 = vpack.c.b16 %v1223, %v1216
    %v1756 = vpack.c.b16 %v1224, %v1217
    %v1757 = vpack.c.b16 %v1225, %v1218
    %v1758 = vpack.c.b16 %v1226, %v1219
    %v1759 = vpack.c.b16 %v1234, %v1227
    %v1760 = vpack.c.b16 %v1235, %v1228
    %v1761 = vpack.c.b16 %v1236, %v1229
    %v1762 = vpack.c.b16 %v1237, %v1230
    %v1763 = vpack.c.b16 %v1238, %v1231
    %v1764 = vpack.c.b16 %v1239, %v1232
    %v1765 = vpack.c.b16 %v1240, %v1233
    %v1766 = vpack.c.b16 %v1248, %v1241
    %v1767 = vpack.c.b16 %v1249, %v1242
    %v1768 = vpack.c.b16 %v1250, %v1243
    %v1769 = vpack.c.b16 %v1251, %v1244
    %v1770 = vpack.c.b16 %v1252, %v1245
    %v1771 = vpack.c.b16 %v1253, %v1246
    %v1772 = vpack.c.b16 %v1254, %v1247
    %v1773 = vpack.c.b16 %v1262, %v1255
    %v1774 = vpack.c.b16 %v1263, %v1256
    %v1775 = vpack.c.b16 %v1264, %v1257
    %v1776 = vpack.c.b16 %v1265, %v1258
    %v1777 = vpack.c.b16 %v1266, %v1259
    %v1778 = vpack.c.b16 %v1267, %v1260
    %v1779 = vpack.c.b16 %v1268, %v1261
    %v1780 = vpack.c.b16 %v1276, %v1269
    %v1781 = vpack.c.b16 %v1277, %v1270
    %v1782 = vpack.c.b16 %v1278, %v1271
    %v1783 = vpack.c.b16 %v1279, %v1272
    %v1784 = vpack.c.b16 %v1280, %v1273
    %v1785 = vpack.c.b16 %v1281, %v1274
    %v1786 = vpack.c.b16 %v1282, %v1275
    %v1787 = vpack.c.b16 %v1290, %v1283
    %v1788 = vpack.c.b16 %v1291, %v1284
    %v1789 = vpack.c.b16 %v1292, %v1285
    %v1790 = vpack.c.b16 %v1293, %v1286
    %v1791 = vpack.c.b16 %v1294, %v1287
    %v1792 = vpack.c.b16 %v1295, %v1288
    %v1793 = vpack.c.b16 %v1296, %v1289
    %v1794 = vpack.c.b16 %v1304, %v1297
    %v1795 = vpack.c.b16 %v1305, %v1298
    %v1796 = vpack.c.b16 %v1306, %v1299
    %v1797 = vpack.c.b16 %v1307, %v1300
    %v1798 = vpack.c.b16 %v1308, %v1301
    %v1799 = vpack.c.b16 %v1309, %v1302
    %v1800 = vpack.c.b16 %v1310, %v1303
    %v1801 = vpack.c.b16 %v1318, %v1311
    %v1802 = vpack.c.b16 %v1319, %v1312
    %v1803 = vpack.c.b16 %v1320, %v1313
    %v1804 = vpack.c.b16 %v1321, %v1314
    %v1805 = vpack.c.b16 %v1322, %v1315
    %v1806 = vpack.c.b16 %v1323, %v1316
    %v1807 = vpack.c.b16 %v1324, %v1317
    %v1808 = vpack.c.b16 %v1332, %v1325
    %v1809 = vpack.c.b16 %v1333, %v1326
    %v1810 = vpack.c.b16 %v1334, %v1327
    %v1811 = vpack.c.b16 %v1335, %v1328
    %v1812 = vpack.c.b16 %v1336, %v1329
    %v1813 = vpack.c.b16 %v1337, %v1330
    %v1814 = vpack.c.b16 %v1338, %v1331
    %v1815 = vpack.c.b16 %v1346, %v1339
    %v1816 = vpack.c.b16 %v1347, %v1340
    %v1817 = vpack.c.b16 %v1348, %v1341
    %v1818 = vpack.c.b16 %v1349, %v1342
    %v1819 = vpack.c.b16 %v1350, %v1343
    %v1820 = vpack.c.b16 %v1351, %v1344
    %v1821 = vpack.c.b16 %v1352, %v1345
    %v1822 = vpack.c.b16 %v1360, %v1353
    %v1823 = vpack.c.b16 %v1361, %v1354
    %v1824 = vpack.c.b16 %v1362, %v1355
    %v1825 = vpack.c.b16 %v1363, %v1356
    %v1826 = vpack.c.b16 %v1364, %v1357
    %v1827 = vpack.c.b16 %v1365, %v1358
    %v1828 = vpack.c.b16 %v1366, %v1359
    %v1829 = vpack.c.b16 %v1374, %v1367
    %v1830 = vpack.c.b16 %v1375, %v1368
    %v1831 = vpack.c.b16 %v1376, %v1369
    %v1832 = vpack.c.b16 %v1377, %v1370
    %v1833 = vpack.c.b16 %v1378, %v1371
    %v1834 = vpack.c.b16 %v1379, %v1372
    %v1835 = vpack.c.b16 %v1380, %v1373
    %v1836 = vpack.c.b16 %v1388, %v1381
    %v1837 = vpack.c.b16 %v1389, %v1382
    %v1838 = vpack.c.b16 %v1390, %v1383
    %v1839 = vpack.c.b16 %v1391, %v1384
    %v1840 = vpack.c.b16 %v1392, %v1385
    %v1841 = vpack.c.b16 %v1393, %v1386
    %v1842 = vpack.c.b16 %v1394, %v1387
    %v1843 = vpack.c.b16 %v1402, %v1395
    %v1844 = vpack.c.b16 %v1403, %v1396
    %v1845 = vpack.c.b16 %v1404, %v1397
    %v1846 = vpack.c.b16 %v1405, %v1398
    %v1847 = vpack.c.b16 %v1406, %v1399
    %v1848 = vpack.c.b16 %v1407, %v1400
    %v1849 = vpack.c.b16 %v1408, %v1401
    %v1850 = vpack.c.b16 %v1416, %v1409
    %v1851 = vpack.c.b16 %v1417, %v1410
    %v1852 = vpack.c.b16 %v1418, %v1411
    %v1853 = vpack.c.b16 %v1419, %v1412
    %v1854 = vpack.c.b16 %v1420, %v1413
    %v1855 = vpack.c.b16 %v1421, %v1414
    %v1856 = vpack.c.b16 %v1422, %v1415
    %v1857 = vpack.c.b16 %v1430, %v1423
    %v1858 = vpack.c.b16 %v1431, %v1424
    %v1859 = vpack.c.b16 %v1432, %v1425
    %v1860 = vpack.c.b16 %v1433, %v1426
    %v1861 = vpack.c.b16 %v1434, %v1427
    %v1862 = vpack.c.b16 %v1435, %v1428
    %v1863 = vpack.c.b16 %v1436, %v1429
    %v1864 = vpack.c.b16 %v1444, %v1437
    %v1865 = vpack.c.b16 %v1445, %v1438
    %v1866 = vpack.c.b16 %v1446, %v1439
    %v1867 = vpack.c.b16 %v1447, %v1440
    %v1868 = vpack.c.b16 %v1448, %v1441
    %v1869 = vpack.c.b16 %v1449, %v1442
    %v1870 = vpack.c.b16 %v1450, %v1443
    %v1871 = vpack.c.b16 %v1458, %v1451
    %v1872 = vpack.c.b16 %v1459, %v1452
    %v1873 = vpack.c.b16 %v1460, %v1453
    %v1874 = vpack.c.b16 %v1461, %v1454
    %v1875 = vpack.c.b16 %v1462, %v1455
    %v1876 = vpack.c.b16 %v1463, %v1456
    %v1877 = vpack.c.b16 %v1464, %v1457
    %v1878 = vpack.c.b16 %v1472, %v1465
    %v1879 = vpack.c.b16 %v1473, %v1466
    %v1880 = vpack.c.b16 %v1474, %v1467
    %v1881 = vpack.c.b16 %v1475, %v1468
    %v1882 = vpack.c.b16 %v1476, %v1469
    %v1883 = vpack.c.b16 %v1477, %v1470
    %v1884 = vpack.c.b16 %v1478, %v1471
    %v1885 = vpack.c.b16 %v1486, %v1479
    %v1886 = vpack.c.b16 %v1487, %v1480
    %v1887 = vpack.c.b16 %v1488, %v1481
    %v1888 = vpack.c.b16 %v1489, %v1482
    %v1889 = vpack.c.b16 %v1490, %v1483
    %v1890 = vpack.c.b16 %v1491, %v1484
    %v1891 = vpack.c.b16 %v1492, %v1485
    %v1892 = vpack.c.b16 %v1500, %v1493
    %v1893 = vpack.c.b16 %v1501, %v1494
    %v1894 = vpack.c.b16 %v1502, %v1495
    %v1895 = vpack.c.b16 %v1503, %v1496
    %v1896 = vpack.c.b16 %v1504, %v1497
    %v1897 = vpack.c.b16 %v1505, %v1498
    %v1898 = vpack.c.b16 %v1506, %v1499
    %v1899 = vpack.c.b16 %v1514, %v1507
    %v1900 = vpack.c.b16 %v1515, %v1508
    %v1901 = vpack.c.b16 %v1516, %v1509
    %v1902 = vpack.c.b16 %v1517, %v1510
    %v1903 = vpack.c.b16 %v1518, %v1511
    %v1904 = vpack.c.b16 %v1519, %v1512
    %v1905 = vpack.c.b16 %v1520, %v1513
    %v1906 = vpack.c.b16 %v1528, %v1521
    %v1907 = vpack.c.b16 %v1529, %v1522
    %v1908 = vpack.c.b16 %v1530, %v1523
    %v1909 = vpack.c.b16 %v1531, %v1524
    %v1910 = vpack.c.b16 %v1532, %v1525
    %v1911 = vpack.c.b16 %v1533, %v1526
    %v1912 = vpack.c.b16 %v1534, %v1527
    %v1913 = vpack.c.b16 %v1542, %v1535
    %v1914 = vpack.c.b16 %v1543, %v1536
    %v1915 = vpack.c.b16 %v1544, %v1537
    %v1916 = vpack.c.b16 %v1545, %v1538
    %v1917 = vpack.c.b16 %v1546, %v1539
    %v1918 = vpack.c.b16 %v1547, %v1540
    %v1919 = vpack.c.b16 %v1548, %v1541
    %v1920 = vpack.c.b16 %v1556, %v1549
    %v1921 = vpack.c.b16 %v1557, %v1550
    %v1922 = vpack.c.b16 %v1558, %v1551
    %v1923 = vpack.c.b16 %v1559, %v1552
    %v1924 = vpack.c.b16 %v1560, %v1553
    %v1925 = vpack.c.b16 %v1561, %v1554
    %v1926 = vpack.c.b16 %v1562, %v1555
    %v1927 = vpack.c.b16 %v1570, %v1563
    %v1928 = vpack.c.b16 %v1571, %v1564
    %v1929 = vpack.c.b16 %v1572, %v1565
    %v1930 = vpack.c.b16 %v1573, %v1566
    %v1931 = vpack.c.b16 %v1574, %v1567
    %v1932 = vpack.c.b16 %v1575, %v1568
    %v1933 = vpack.c.b16 %v1576, %v1569
    %v1934 = vpack.c.b16 %v1584, %v1577
    %v1935 = vpack.c.b16 %v1585, %v1578
    %v1936 = vpack.c.b16 %v1586, %v1579
    %v1937 = vpack.c.b16 %v1587, %v1580
    %v1938 = vpack.c.b16 %v1588, %v1581
    %v1939 = vpack.c.b16 %v1589, %v1582
    %v1940 = vpack.c.b16 %v1590, %v1583
    %v1941 = vpack.c.b16 %v1598, %v1591
    %v1942 = vpack.c.b16 %v1599, %v1592
    %v1943 = vpack.c.b16 %v1600, %v1593
    %v1944 = vpack.c.b16 %v1601, %v1594
    %v1945 = vpack.c.b16 %v1602, %v1595
    %v1946 = vpack.c.b16 %v1603, %v1596
    %v1947 = vpack.c.b16 %v1604, %v1597
    %vm2291 = vcmask 130048
    %v2293 = vsel %vm2291, %v97, 0
    %2295 = vmatprep.subr.bf16.mxu0 %v1655
    %2296 = vmatpush1.bf16.msra.mxu0 %v1654
    %2297 = vmatprep.subr.bf16.mxu0 %v1648
    %2298 = vmatpush1.bf16.msra.mxu0 %v1647
    %2299 = vmatprep.subr.bf16.mxu0 %v1641
    %2300 = vmatpush1.bf16.msra.mxu0 %v1640
    %2301 = vmatprep.subr.bf16.mxu0 %v1634
    %2302 = vmatpush1.bf16.msra.mxu0 %v1633
    %2303 = vmatprep.subr.bf16.mxu0 %v1627
    %2304 = vmatpush1.bf16.msra.mxu0 %v1626
    %2305 = vmatprep.subr.bf16.mxu0 %v1620
    %2306 = vmatpush1.bf16.msra.mxu0 %v1619
    %2307 = vmatprep.subr.bf16.mxu0 %v1613
    %2308 = vmatpush1.bf16.msra.mxu0 %v1612
    %2309 = vmatprep.subr.bf16.mxu0 %v1606
    %2310 = vmatpush1.bf16.msra.mxu0 %v1605
    %2311 = vmatprep.subr.bf16.mxu0 %v1711
    %2312 = vmatpush2.bf16.msra.mxu0 %v1710
    %2313 = vmatprep.subr.bf16.mxu0 %v1704
    %2314 = vmatpush2.bf16.msra.mxu0 %v1703
    %2315 = vmatprep.subr.bf16.mxu0 %v1697
    %2316 = vmatpush2.bf16.msra.mxu0 %v1696
    %2317 = vmatprep.subr.bf16.mxu0 %v1690
    %2318 = vmatpush2.bf16.msra.mxu0 %v1689
    %2319 = vmatprep.subr.bf16.mxu0 %v1683
    %2320 = vmatpush2.bf16.msra.mxu0 %v1682
    %2321 = vmatprep.subr.bf16.mxu0 %v1676
    %2322 = vmatpush2.bf16.msra.mxu0 %v1675
    %2323 = vmatprep.subr.bf16.mxu0 %v1669
    %2324 = vmatpush2.bf16.msra.mxu0 %v1668
    %2325 = vmatprep.subr.bf16.mxu0 %v1662
    %2326 = vmatpush2.bf16.msra.mxu0 %v1661
    %2327 = vmatprep.mubr.bf16.mxu0 %v92
    %2328 = vmatmul.mubr.bf16.gmra.mxu0 %v91
    %v2329 = vpop.f32.mrf.mxu0
    %v2330 = vadd.f32 %v495, %v2329
    %v2331 = vpop.f32.mrf.mxu0
    %v2332 = vadd.f32 %v499, %v2331
    %v2333 = vpop.f32.mrf.mxu0
    %v2334 = vpop.f32.mrf.mxu0
    %2335 = vdwg.mxu0
    %2336 = vmatprep.subr.bf16.mxu0 %v1767
    %2337 = vmatpush1.bf16.msra.mxu0 %v1766
    %2338 = vmatprep.subr.bf16.mxu0 %v1760
    %2339 = vmatpush1.bf16.msra.mxu0 %v1759
    %2340 = vmatprep.subr.bf16.mxu0 %v1753
    %2341 = vmatpush1.bf16.msra.mxu0 %v1752
    %2342 = vmatprep.subr.bf16.mxu0 %v1746
    %2343 = vmatpush1.bf16.msra.mxu0 %v1745
    %2344 = vmatprep.subr.bf16.mxu0 %v1739
    %2345 = vmatpush1.bf16.msra.mxu0 %v1738
    %2346 = vmatprep.subr.bf16.mxu0 %v1732
    %2347 = vmatpush1.bf16.msra.mxu0 %v1731
    %2348 = vmatprep.subr.bf16.mxu0 %v1725
    %2349 = vmatpush1.bf16.msra.mxu0 %v1724
    %2350 = vmatprep.subr.bf16.mxu0 %v1718
    %2351 = vmatpush1.bf16.msra.mxu0 %v1717
    %2352 = vmatprep.subr.bf16.mxu0 %v1823
    %2353 = vmatpush2.bf16.msra.mxu0 %v1822
    %2354 = vmatprep.subr.bf16.mxu0 %v1816
    %2355 = vmatpush2.bf16.msra.mxu0 %v1815
    %2356 = vmatprep.subr.bf16.mxu0 %v1809
    %2357 = vmatpush2.bf16.msra.mxu0 %v1808
    %2358 = vmatprep.subr.bf16.mxu0 %v1802
    %2359 = vmatpush2.bf16.msra.mxu0 %v1801
    %2360 = vmatprep.subr.bf16.mxu0 %v1795
    %2361 = vmatpush2.bf16.msra.mxu0 %v1794
    %2362 = vmatprep.subr.bf16.mxu0 %v1788
    %2363 = vmatpush2.bf16.msra.mxu0 %v1787
    %2364 = vmatprep.subr.bf16.mxu0 %v1781
    %2365 = vmatpush2.bf16.msra.mxu0 %v1780
    %2366 = vmatprep.subr.bf16.mxu0 %v1774
    %2367 = vmatpush2.bf16.msra.mxu0 %v1773
    %2368 = vmatprep.mubr.bf16.mxu0 %v94
    %2369 = vmatmul.mubr.bf16.gmra.mxu0 %v93
    %v2370 = vpop.f32.mrf.mxu0
    %v2371 = vadd.f32 %v2330, %v2370
    %v2372 = vpop.f32.mrf.mxu0
    %v2373 = vadd.f32 %v2332, %v2372
    %v2374 = vpop.f32.mrf.mxu0
    %v2375 = vpop.f32.mrf.mxu0
    %2376 = vdwg.mxu0
    %2377 = vmatprep.subr.bf16.mxu0 %v1879
    %2378 = vmatpush1.bf16.msra.mxu0 %v1878
    %2379 = vmatprep.subr.bf16.mxu0 %v1872
    %2380 = vmatpush1.bf16.msra.mxu0 %v1871
    %2381 = vmatprep.subr.bf16.mxu0 %v1865
    %2382 = vmatpush1.bf16.msra.mxu0 %v1864
    %2383 = vmatprep.subr.bf16.mxu0 %v1858
    %2384 = vmatpush1.bf16.msra.mxu0 %v1857
    %2385 = vmatprep.subr.bf16.mxu0 %v1851
    %2386 = vmatpush1.bf16.msra.mxu0 %v1850
    %2387 = vmatprep.subr.bf16.mxu0 %v1844
    %2388 = vmatpush1.bf16.msra.mxu0 %v1843
    %2389 = vmatprep.subr.bf16.mxu0 %v1837
    %2390 = vmatpush1.bf16.msra.mxu0 %v1836
    %2391 = vmatprep.subr.bf16.mxu0 %v1830
    %2392 = vmatpush1.bf16.msra.mxu0 %v1829
    %2393 = vmatprep.subr.bf16.mxu0 %v1935
    %2394 = vmatpush2.bf16.msra.mxu0 %v1934
    %2395 = vmatprep.subr.bf16.mxu0 %v1928
    %2396 = vmatpush2.bf16.msra.mxu0 %v1927
    %2397 = vmatprep.subr.bf16.mxu0 %v1921
    %2398 = vmatpush2.bf16.msra.mxu0 %v1920
    %2399 = vmatprep.subr.bf16.mxu0 %v1914
    %2400 = vmatpush2.bf16.msra.mxu0 %v1913
    %2401 = vmatprep.subr.bf16.mxu0 %v1907
    %2402 = vmatpush2.bf16.msra.mxu0 %v1906
    %2403 = vmatprep.subr.bf16.mxu0 %v1900
    %2404 = vmatpush2.bf16.msra.mxu0 %v1899
    %2405 = vmatprep.subr.bf16.mxu0 %v1893
    %2406 = vmatpush2.bf16.msra.mxu0 %v1892
    %2407 = vmatprep.subr.bf16.mxu0 %v1886
    %2408 = vmatpush2.bf16.msra.mxu0 %v1885
    %2409 = vmatprep.mubr.bf16.mxu0 %v96
    %2410 = vmatmul.mubr.bf16.gmra.mxu0 %v95
    %v2411 = vpop.f32.mrf.mxu0
    %v2412 = vadd.f32 %v2371, %v2411
    %v2413 = vpop.f32.mrf.mxu0
    %v2414 = vadd.f32 %v2373, %v2413
    %v2415 = vpop.f32.mrf.mxu0
    %v2416 = vpop.f32.mrf.mxu0
    %2417 = vdwg.mxu0
    %2418 = vmatprep.subr.bf16.mxu0 0
    %2419 = vmatpush1.bf16.msra.mxu0 0
    %2420 = vmatprep.subr.bf16.mxu0 0
    %2421 = vmatpush1.bf16.msra.mxu0 0
    %2422 = vmatprep.subr.bf16.mxu0 0
    %2423 = vmatpush1.bf16.msra.mxu0 0
    %2424 = vmatprep.subr.bf16.mxu0 0
    %2425 = vmatpush1.bf16.msra.mxu0 0
    %2426 = vmatprep.subr.bf16.mxu0 0
    %2427 = vmatpush1.bf16.msra.mxu0 0
    %2428 = vmatprep.subr.bf16.mxu0 0
    %2429 = vmatpush1.bf16.msra.mxu0 0
    %2430 = vmatprep.subr.bf16.mxu0 0
    %2431 = vmatpush1.bf16.msra.mxu0 0
    %2432 = vmatprep.subr.bf16.mxu0 %v1942
    %2433 = vmatpush1.bf16.msra.mxu0 %v1941
    %2434 = vmatprep.subr.bf16.mxu0 0
    %2435 = vmatpush2.bf16.msra.mxu0 0
    %2436 = vmatprep.subr.bf16.mxu0 0
    %2437 = vmatpush2.bf16.msra.mxu0 0
    %2438 = vmatprep.subr.bf16.mxu0 0
    %2439 = vmatpush2.bf16.msra.mxu0 0
    %2440 = vmatprep.subr.bf16.mxu0 0
    %2441 = vmatpush2.bf16.msra.mxu0 0
    %2442 = vmatprep.subr.bf16.mxu0 0
    %2443 = vmatpush2.bf16.msra.mxu0 0
    %2444 = vmatprep.subr.bf16.mxu0 0
    %2445 = vmatpush2.bf16.msra.mxu0 0
    %2446 = vmatprep.subr.bf16.mxu0 0
    %2447 = vmatpush2.bf16.msra.mxu0 0
    %2448 = vmatprep.subr.bf16.mxu0 0
    %2449 = vmatpush2.bf16.msra.mxu0 0
    %2450 = vmatprep.mubr.bf16.mxu0 0
    %2451 = vmatmul.mubr.bf16.gmra.mxu0 %v2293
    %v2452 = vpop.f32.mrf.mxu0
    %v2453 = vadd.f32 %v2412, %v2452
    %v2454 = vpop.f32.mrf.mxu0
    %v2455 = vadd.f32 %v2414, %v2454
    %v2456 = vpop.f32.mrf.mxu0
    %v2457 = vpop.f32.mrf.mxu0
    %2458 = vdwg.mxu0
    %2459 = vmatprep.subr.bf16.mxu0 %v1657
    %2460 = vmatpush1.bf16.msra.mxu0 %v1656
    %2461 = vmatprep.subr.bf16.mxu0 %v1650
    %2462 = vmatpush1.bf16.msra.mxu0 %v1649
    %2463 = vmatprep.subr.bf16.mxu0 %v1643
    %2464 = vmatpush1.bf16.msra.mxu0 %v1642
    %2465 = vmatprep.subr.bf16.mxu0 %v1636
    %2466 = vmatpush1.bf16.msra.mxu0 %v1635
    %2467 = vmatprep.subr.bf16.mxu0 %v1629
    %2468 = vmatpush1.bf16.msra.mxu0 %v1628
    %2469 = vmatprep.subr.bf16.mxu0 %v1622
    %2470 = vmatpush1.bf16.msra.mxu0 %v1621
    %2471 = vmatprep.subr.bf16.mxu0 %v1615
    %2472 = vmatpush1.bf16.msra.mxu0 %v1614
    %2473 = vmatprep.subr.bf16.mxu0 %v1608
    %2474 = vmatpush1.bf16.msra.mxu0 %v1607
    %2475 = vmatprep.subr.bf16.mxu0 %v1713
    %2476 = vmatpush2.bf16.msra.mxu0 %v1712
    %2477 = vmatprep.subr.bf16.mxu0 %v1706
    %2478 = vmatpush2.bf16.msra.mxu0 %v1705
    %2479 = vmatprep.subr.bf16.mxu0 %v1699
    %2480 = vmatpush2.bf16.msra.mxu0 %v1698
    %2481 = vmatprep.subr.bf16.mxu0 %v1692
    %2482 = vmatpush2.bf16.msra.mxu0 %v1691
    %2483 = vmatprep.subr.bf16.mxu0 %v1685
    %2484 = vmatpush2.bf16.msra.mxu0 %v1684
    %2485 = vmatprep.subr.bf16.mxu0 %v1678
    %2486 = vmatpush2.bf16.msra.mxu0 %v1677
    %2487 = vmatprep.subr.bf16.mxu0 %v1671
    %2488 = vmatpush2.bf16.msra.mxu0 %v1670
    %2489 = vmatprep.subr.bf16.mxu0 %v1664
    %2490 = vmatpush2.bf16.msra.mxu0 %v1663
    %2491 = vmatprep.mubr.bf16.mxu0 %v92
    %2492 = vmatmul.mubr.bf16.gmra.mxu0 %v91
    %v2493 = vpop.f32.mrf.mxu0
    %v2494 = vadd.f32 %v503, %v2493
    %v2495 = vpop.f32.mrf.mxu0
    %v2496 = vadd.f32 %v507, %v2495
    %v2497 = vpop.f32.mrf.mxu0
    %v2498 = vpop.f32.mrf.mxu0
    %2499 = vdwg.mxu0
    %2500 = vmatprep.subr.bf16.mxu0 %v1769
    %2501 = vmatpush1.bf16.msra.mxu0 %v1768
    %2502 = vmatprep.subr.bf16.mxu0 %v1762
    %2503 = vmatpush1.bf16.msra.mxu0 %v1761
    %2504 = vmatprep.subr.bf16.mxu0 %v1755
    %2505 = vmatpush1.bf16.msra.mxu0 %v1754
    %2506 = vmatprep.subr.bf16.mxu0 %v1748
    %2507 = vmatpush1.bf16.msra.mxu0 %v1747
    %2508 = vmatprep.subr.bf16.mxu0 %v1741
    %2509 = vmatpush1.bf16.msra.mxu0 %v1740
    %2510 = vmatprep.subr.bf16.mxu0 %v1734
    %2511 = vmatpush1.bf16.msra.mxu0 %v1733
    %2512 = vmatprep.subr.bf16.mxu0 %v1727
    %2513 = vmatpush1.bf16.msra.mxu0 %v1726
    %2514 = vmatprep.subr.bf16.mxu0 %v1720
    %2515 = vmatpush1.bf16.msra.mxu0 %v1719
    %2516 = vmatprep.subr.bf16.mxu0 %v1825
    %2517 = vmatpush2.bf16.msra.mxu0 %v1824
    %2518 = vmatprep.subr.bf16.mxu0 %v1818
    %2519 = vmatpush2.bf16.msra.mxu0 %v1817
    %2520 = vmatprep.subr.bf16.mxu0 %v1811
    %2521 = vmatpush2.bf16.msra.mxu0 %v1810
    %2522 = vmatprep.subr.bf16.mxu0 %v1804
    %2523 = vmatpush2.bf16.msra.mxu0 %v1803
    %2524 = vmatprep.subr.bf16.mxu0 %v1797
    %2525 = vmatpush2.bf16.msra.mxu0 %v1796
    %2526 = vmatprep.subr.bf16.mxu0 %v1790
    %2527 = vmatpush2.bf16.msra.mxu0 %v1789
    %2528 = vmatprep.subr.bf16.mxu0 %v1783
    %2529 = vmatpush2.bf16.msra.mxu0 %v1782
    %2530 = vmatprep.subr.bf16.mxu0 %v1776
    %2531 = vmatpush2.bf16.msra.mxu0 %v1775
    %2532 = vmatprep.mubr.bf16.mxu0 %v94
    %2533 = vmatmul.mubr.bf16.gmra.mxu0 %v93
    %v2534 = vpop.f32.mrf.mxu0
    %v2535 = vadd.f32 %v2494, %v2534
    %v2536 = vpop.f32.mrf.mxu0
    %v2537 = vadd.f32 %v2496, %v2536
    %v2538 = vpop.f32.mrf.mxu0
    %v2539 = vpop.f32.mrf.mxu0
    %2540 = vdwg.mxu0
    %2541 = vmatprep.subr.bf16.mxu0 %v1881
    %2542 = vmatpush1.bf16.msra.mxu0 %v1880
    %2543 = vmatprep.subr.bf16.mxu0 %v1874
    %2544 = vmatpush1.bf16.msra.mxu0 %v1873
    %2545 = vmatprep.subr.bf16.mxu0 %v1867
    %2546 = vmatpush1.bf16.msra.mxu0 %v1866
    %2547 = vmatprep.subr.bf16.mxu0 %v1860
    %2548 = vmatpush1.bf16.msra.mxu0 %v1859
    %2549 = vmatprep.subr.bf16.mxu0 %v1853
    %2550 = vmatpush1.bf16.msra.mxu0 %v1852
    %2551 = vmatprep.subr.bf16.mxu0 %v1846
    %2552 = vmatpush1.bf16.msra.mxu0 %v1845
    %2553 = vmatprep.subr.bf16.mxu0 %v1839
    %2554 = vmatpush1.bf16.msra.mxu0 %v1838
    %2555 = vmatprep.subr.bf16.mxu0 %v1832
    %2556 = vmatpush1.bf16.msra.mxu0 %v1831
    %2557 = vmatprep.subr.bf16.mxu0 %v1937
    %2558 = vmatpush2.bf16.msra.mxu0 %v1936
    %2559 = vmatprep.subr.bf16.mxu0 %v1930
    %2560 = vmatpush2.bf16.msra.mxu0 %v1929
    %2561 = vmatprep.subr.bf16.mxu0 %v1923
    %2562 = vmatpush2.bf16.msra.mxu0 %v1922
    %2563 = vmatprep.subr.bf16.mxu0 %v1916
    %2564 = vmatpush2.bf16.msra.mxu0 %v1915
    %2565 = vmatprep.subr.bf16.mxu0 %v1909
    %2566 = vmatpush2.bf16.msra.mxu0 %v1908
    %2567 = vmatprep.subr.bf16.mxu0 %v1902
    %2568 = vmatpush2.bf16.msra.mxu0 %v1901
    %2569 = vmatprep.subr.bf16.mxu0 %v1895
    %2570 = vmatpush2.bf16.msra.mxu0 %v1894
    %2571 = vmatprep.subr.bf16.mxu0 %v1888
    %2572 = vmatpush2.bf16.msra.mxu0 %v1887
    %2573 = vmatprep.mubr.bf16.mxu0 %v96
    %2574 = vmatmul.mubr.bf16.gmra.mxu0 %v95
    %v2575 = vpop.f32.mrf.mxu0
    %v2576 = vadd.f32 %v2535, %v2575
    %v2577 = vpop.f32.mrf.mxu0
    %v2578 = vadd.f32 %v2537, %v2577
    %v2579 = vpop.f32.mrf.mxu0
    %v2580 = vpop.f32.mrf.mxu0
    %2581 = vdwg.mxu0
    %2582 = vmatprep.subr.bf16.mxu0 0
    %2583 = vmatpush1.bf16.msra.mxu0 0
    %2584 = vmatprep.subr.bf16.mxu0 0
    %2585 = vmatpush1.bf16.msra.mxu0 0
    %2586 = vmatprep.subr.bf16.mxu0 0
    %2587 = vmatpush1.bf16.msra.mxu0 0
    %2588 = vmatprep.subr.bf16.mxu0 0
    %2589 = vmatpush1.bf16.msra.mxu0 0
    %2590 = vmatprep.subr.bf16.mxu0 0
    %2591 = vmatpush1.bf16.msra.mxu0 0
    %2592 = vmatprep.subr.bf16.mxu0 0
    %2593 = vmatpush1.bf16.msra.mxu0 0
    %2594 = vmatprep.subr.bf16.mxu0 0
    %2595 = vmatpush1.bf16.msra.mxu0 0
    %2596 = vmatprep.subr.bf16.mxu0 %v1944
    %2597 = vmatpush1.bf16.msra.mxu0 %v1943
    %2598 = vmatprep.subr.bf16.mxu0 0
    %2599 = vmatpush2.bf16.msra.mxu0 0
    %2600 = vmatprep.subr.bf16.mxu0 0
    %2601 = vmatpush2.bf16.msra.mxu0 0
    %2602 = vmatprep.subr.bf16.mxu0 0
    %2603 = vmatpush2.bf16.msra.mxu0 0
    %2604 = vmatprep.subr.bf16.mxu0 0
    %2605 = vmatpush2.bf16.msra.mxu0 0
    %2606 = vmatprep.subr.bf16.mxu0 0
    %2607 = vmatpush2.bf16.msra.mxu0 0
    %2608 = vmatprep.subr.bf16.mxu0 0
    %2609 = vmatpush2.bf16.msra.mxu0 0
    %2610 = vmatprep.subr.bf16.mxu0 0
    %2611 = vmatpush2.bf16.msra.mxu0 0
    %2612 = vmatprep.subr.bf16.mxu0 0
    %2613 = vmatpush2.bf16.msra.mxu0 0
    %2614 = vmatprep.mubr.bf16.mxu0 0
    %2615 = vmatmul.mubr.bf16.gmra.mxu0 %v2293
    %v2616 = vpop.f32.mrf.mxu0
    %v2617 = vadd.f32 %v2576, %v2616
    %v2618 = vpop.f32.mrf.mxu0
    %v2619 = vadd.f32 %v2578, %v2618
    %v2620 = vpop.f32.mrf.mxu0
    %v2621 = vpop.f32.mrf.mxu0
    %2622 = vdwg.mxu0
    %2623 = vmatprep.subr.bf16.mxu0 %v1659
    %2624 = vmatpush1.bf16.msra.mxu0 %v1658
    %2625 = vmatprep.subr.bf16.mxu0 %v1652
    %2626 = vmatpush1.bf16.msra.mxu0 %v1651
    %2627 = vmatprep.subr.bf16.mxu0 %v1645
    %2628 = vmatpush1.bf16.msra.mxu0 %v1644
    %2629 = vmatprep.subr.bf16.mxu0 %v1638
    %2630 = vmatpush1.bf16.msra.mxu0 %v1637
    %2631 = vmatprep.subr.bf16.mxu0 %v1631
    %2632 = vmatpush1.bf16.msra.mxu0 %v1630
    %2633 = vmatprep.subr.bf16.mxu0 %v1624
    %2634 = vmatpush1.bf16.msra.mxu0 %v1623
    %2635 = vmatprep.subr.bf16.mxu0 %v1617
    %2636 = vmatpush1.bf16.msra.mxu0 %v1616
    %2637 = vmatprep.subr.bf16.mxu0 %v1610
    %2638 = vmatpush1.bf16.msra.mxu0 %v1609
    %2639 = vmatprep.subr.bf16.mxu0 %v1715
    %2640 = vmatpush2.bf16.msra.mxu0 %v1714
    %2641 = vmatprep.subr.bf16.mxu0 %v1708
    %2642 = vmatpush2.bf16.msra.mxu0 %v1707
    %2643 = vmatprep.subr.bf16.mxu0 %v1701
    %2644 = vmatpush2.bf16.msra.mxu0 %v1700
    %2645 = vmatprep.subr.bf16.mxu0 %v1694
    %2646 = vmatpush2.bf16.msra.mxu0 %v1693
    %2647 = vmatprep.subr.bf16.mxu0 %v1687
    %2648 = vmatpush2.bf16.msra.mxu0 %v1686
    %2649 = vmatprep.subr.bf16.mxu0 %v1680
    %2650 = vmatpush2.bf16.msra.mxu0 %v1679
    %2651 = vmatprep.subr.bf16.mxu0 %v1673
    %2652 = vmatpush2.bf16.msra.mxu0 %v1672
    %2653 = vmatprep.subr.bf16.mxu0 %v1666
    %2654 = vmatpush2.bf16.msra.mxu0 %v1665
    %2655 = vmatprep.mubr.bf16.mxu0 %v92
    %2656 = vmatmul.mubr.bf16.gmra.mxu0 %v91
    %v2657 = vpop.f32.mrf.mxu0
    %v2658 = vadd.f32 %v511, %v2657
    %v2659 = vpop.f32.mrf.mxu0
    %v2660 = vadd.f32 %v515, %v2659
    %v2661 = vpop.f32.mrf.mxu0
    %v2662 = vpop.f32.mrf.mxu0
    %2663 = vdwg.mxu0
    %2664 = vmatprep.subr.bf16.mxu0 %v1771
    %2665 = vmatpush1.bf16.msra.mxu0 %v1770
    %2666 = vmatprep.subr.bf16.mxu0 %v1764
    %2667 = vmatpush1.bf16.msra.mxu0 %v1763
    %2668 = vmatprep.subr.bf16.mxu0 %v1757
    %2669 = vmatpush1.bf16.msra.mxu0 %v1756
    %2670 = vmatprep.subr.bf16.mxu0 %v1750
    %2671 = vmatpush1.bf16.msra.mxu0 %v1749
    %2672 = vmatprep.subr.bf16.mxu0 %v1743
    %2673 = vmatpush1.bf16.msra.mxu0 %v1742
    %2674 = vmatprep.subr.bf16.mxu0 %v1736
    %2675 = vmatpush1.bf16.msra.mxu0 %v1735
    %2676 = vmatprep.subr.bf16.mxu0 %v1729
    %2677 = vmatpush1.bf16.msra.mxu0 %v1728
    %2678 = vmatprep.subr.bf16.mxu0 %v1722
    %2679 = vmatpush1.bf16.msra.mxu0 %v1721
    %2680 = vmatprep.subr.bf16.mxu0 %v1827
    %2681 = vmatpush2.bf16.msra.mxu0 %v1826
    %2682 = vmatprep.subr.bf16.mxu0 %v1820
    %2683 = vmatpush2.bf16.msra.mxu0 %v1819
    %2684 = vmatprep.subr.bf16.mxu0 %v1813
    %2685 = vmatpush2.bf16.msra.mxu0 %v1812
    %2686 = vmatprep.subr.bf16.mxu0 %v1806
    %2687 = vmatpush2.bf16.msra.mxu0 %v1805
    %2688 = vmatprep.subr.bf16.mxu0 %v1799
    %2689 = vmatpush2.bf16.msra.mxu0 %v1798
    %2690 = vmatprep.subr.bf16.mxu0 %v1792
    %2691 = vmatpush2.bf16.msra.mxu0 %v1791
    %2692 = vmatprep.subr.bf16.mxu0 %v1785
    %2693 = vmatpush2.bf16.msra.mxu0 %v1784
    %2694 = vmatprep.subr.bf16.mxu0 %v1778
    %2695 = vmatpush2.bf16.msra.mxu0 %v1777
    %2696 = vmatprep.mubr.bf16.mxu0 %v94
    %2697 = vmatmul.mubr.bf16.gmra.mxu0 %v93
    %v2698 = vpop.f32.mrf.mxu0
    %v2699 = vadd.f32 %v2658, %v2698
    %v2700 = vpop.f32.mrf.mxu0
    %v2701 = vadd.f32 %v2660, %v2700
    %v2702 = vpop.f32.mrf.mxu0
    %v2703 = vpop.f32.mrf.mxu0
    %2704 = vdwg.mxu0
    %2705 = vmatprep.subr.bf16.mxu0 %v1883
    %2706 = vmatpush1.bf16.msra.mxu0 %v1882
    %2707 = vmatprep.subr.bf16.mxu0 %v1876
    %2708 = vmatpush1.bf16.msra.mxu0 %v1875
    %2709 = vmatprep.subr.bf16.mxu0 %v1869
    %2710 = vmatpush1.bf16.msra.mxu0 %v1868
    %2711 = vmatprep.subr.bf16.mxu0 %v1862
    %2712 = vmatpush1.bf16.msra.mxu0 %v1861
    %2713 = vmatprep.subr.bf16.mxu0 %v1855
    %2714 = vmatpush1.bf16.msra.mxu0 %v1854
    %2715 = vmatprep.subr.bf16.mxu0 %v1848
    %2716 = vmatpush1.bf16.msra.mxu0 %v1847
    %2717 = vmatprep.subr.bf16.mxu0 %v1841
    %2718 = vmatpush1.bf16.msra.mxu0 %v1840
    %2719 = vmatprep.subr.bf16.mxu0 %v1834
    %2720 = vmatpush1.bf16.msra.mxu0 %v1833
    %2721 = vmatprep.subr.bf16.mxu0 %v1939
    %2722 = vmatpush2.bf16.msra.mxu0 %v1938
    %2723 = vmatprep.subr.bf16.mxu0 %v1932
    %2724 = vmatpush2.bf16.msra.mxu0 %v1931
    %2725 = vmatprep.subr.bf16.mxu0 %v1925
    %2726 = vmatpush2.bf16.msra.mxu0 %v1924
    %2727 = vmatprep.subr.bf16.mxu0 %v1918
    %2728 = vmatpush2.bf16.msra.mxu0 %v1917
    %2729 = vmatprep.subr.bf16.mxu0 %v1911
    %2730 = vmatpush2.bf16.msra.mxu0 %v1910
    %2731 = vmatprep.subr.bf16.mxu0 %v1904
    %2732 = vmatpush2.bf16.msra.mxu0 %v1903
    %2733 = vmatprep.subr.bf16.mxu0 %v1897
    %2734 = vmatpush2.bf16.msra.mxu0 %v1896
    %2735 = vmatprep.subr.bf16.mxu0 %v1890
    %2736 = vmatpush2.bf16.msra.mxu0 %v1889
    %2737 = vmatprep.mubr.bf16.mxu0 %v96
    %2738 = vmatmul.mubr.bf16.gmra.mxu0 %v95
    %v2739 = vpop.f32.mrf.mxu0
    %v2740 = vadd.f32 %v2699, %v2739
    %v2741 = vpop.f32.mrf.mxu0
    %v2742 = vadd.f32 %v2701, %v2741
    %v2743 = vpop.f32.mrf.mxu0
    %v2744 = vpop.f32.mrf.mxu0
    %2745 = vdwg.mxu0
    %2746 = vmatprep.subr.bf16.mxu0 0
    %2747 = vmatpush1.bf16.msra.mxu0 0
    %2748 = vmatprep.subr.bf16.mxu0 0
    %2749 = vmatpush1.bf16.msra.mxu0 0
    %2750 = vmatprep.subr.bf16.mxu0 0
    %2751 = vmatpush1.bf16.msra.mxu0 0
    %2752 = vmatprep.subr.bf16.mxu0 0
    %2753 = vmatpush1.bf16.msra.mxu0 0
    %2754 = vmatprep.subr.bf16.mxu0 0
    %2755 = vmatpush1.bf16.msra.mxu0 0
    %2756 = vmatprep.subr.bf16.mxu0 0
    %2757 = vmatpush1.bf16.msra.mxu0 0
    %2758 = vmatprep.subr.bf16.mxu0 0
    %2759 = vmatpush1.bf16.msra.mxu0 0
    %2760 = vmatprep.subr.bf16.mxu0 %v1946
    %2761 = vmatpush1.bf16.msra.mxu0 %v1945
    %2762 = vmatprep.subr.bf16.mxu0 0
    %2763 = vmatpush2.bf16.msra.mxu0 0
    %2764 = vmatprep.subr.bf16.mxu0 0
    %2765 = vmatpush2.bf16.msra.mxu0 0
    %2766 = vmatprep.subr.bf16.mxu0 0
    %2767 = vmatpush2.bf16.msra.mxu0 0
    %2768 = vmatprep.subr.bf16.mxu0 0
    %2769 = vmatpush2.bf16.msra.mxu0 0
    %2770 = vmatprep.subr.bf16.mxu0 0
    %2771 = vmatpush2.bf16.msra.mxu0 0
    %2772 = vmatprep.subr.bf16.mxu0 0
    %2773 = vmatpush2.bf16.msra.mxu0 0
    %2774 = vmatprep.subr.bf16.mxu0 0
    %2775 = vmatpush2.bf16.msra.mxu0 0
    %2776 = vmatprep.subr.bf16.mxu0 0
    %2777 = vmatpush2.bf16.msra.mxu0 0
    %2778 = vmatprep.mubr.bf16.mxu0 0
    %2779 = vmatmul.mubr.bf16.gmra.mxu0 %v2293
    %v2780 = vpop.f32.mrf.mxu0
    %v2781 = vadd.f32 %v2740, %v2780
    %v2782 = vpop.f32.mrf.mxu0
    %v2783 = vadd.f32 %v2742, %v2782
    %v2784 = vpop.f32.mrf.mxu0
    %v2785 = vpop.f32.mrf.mxu0
    %2786 = vdwg.mxu0
    %2787 = vmatprep.subr.bf16.mxu0 0
    %2788 = vmatpush1.bf16.msra.mxu0 %v1660
    %2789 = vmatprep.subr.bf16.mxu0 0
    %2790 = vmatpush1.bf16.msra.mxu0 %v1653
    %2791 = vmatprep.subr.bf16.mxu0 0
    %2792 = vmatpush1.bf16.msra.mxu0 %v1646
    %2793 = vmatprep.subr.bf16.mxu0 0
    %2794 = vmatpush1.bf16.msra.mxu0 %v1639
    %2795 = vmatprep.subr.bf16.mxu0 0
    %2796 = vmatpush1.bf16.msra.mxu0 %v1632
    %2797 = vmatprep.subr.bf16.mxu0 0
    %2798 = vmatpush1.bf16.msra.mxu0 %v1625
    %2799 = vmatprep.subr.bf16.mxu0 0
    %2800 = vmatpush1.bf16.msra.mxu0 %v1618
    %2801 = vmatprep.subr.bf16.mxu0 0
    %2802 = vmatpush1.bf16.msra.mxu0 %v1611
    %2803 = vmatprep.subr.bf16.mxu0 0
    %2804 = vmatpush2.bf16.msra.mxu0 %v1716
    %2805 = vmatprep.subr.bf16.mxu0 0
    %2806 = vmatpush2.bf16.msra.mxu0 %v1709
    %2807 = vmatprep.subr.bf16.mxu0 0
    %2808 = vmatpush2.bf16.msra.mxu0 %v1702
    %2809 = vmatprep.subr.bf16.mxu0 0
    %2810 = vmatpush2.bf16.msra.mxu0 %v1695
    %2811 = vmatprep.subr.bf16.mxu0 0
    %2812 = vmatpush2.bf16.msra.mxu0 %v1688
    %2813 = vmatprep.subr.bf16.mxu0 0
    %2814 = vmatpush2.bf16.msra.mxu0 %v1681
    %2815 = vmatprep.subr.bf16.mxu0 0
    %2816 = vmatpush2.bf16.msra.mxu0 %v1674
    %2817 = vmatprep.subr.bf16.mxu0 0
    %2818 = vmatpush2.bf16.msra.mxu0 %v1667
    %2819 = vmatprep.mubr.bf16.mxu0 %v92
    %2820 = vmatmul.mubr.bf16.gmra.mxu0 %v91
    %v2821 = vpop.f32.mrf.mxu0
    %v2822 = vadd.f32 %v519, %v2821
    %v2823 = vpop.f32.mrf.mxu0
    %v2824 = vpop.f32.mrf.mxu0
    %v2825 = vpop.f32.mrf.mxu0
    %2826 = vdwg.mxu0
    %2827 = vmatprep.subr.bf16.mxu0 0
    %2828 = vmatpush1.bf16.msra.mxu0 %v1772
    %2829 = vmatprep.subr.bf16.mxu0 0
    %2830 = vmatpush1.bf16.msra.mxu0 %v1765
    %2831 = vmatprep.subr.bf16.mxu0 0
    %2832 = vmatpush1.bf16.msra.mxu0 %v1758
    %2833 = vmatprep.subr.bf16.mxu0 0
    %2834 = vmatpush1.bf16.msra.mxu0 %v1751
    %2835 = vmatprep.subr.bf16.mxu0 0
    %2836 = vmatpush1.bf16.msra.mxu0 %v1744
    %2837 = vmatprep.subr.bf16.mxu0 0
    %2838 = vmatpush1.bf16.msra.mxu0 %v1737
    %2839 = vmatprep.subr.bf16.mxu0 0
    %2840 = vmatpush1.bf16.msra.mxu0 %v1730
    %2841 = vmatprep.subr.bf16.mxu0 0
    %2842 = vmatpush1.bf16.msra.mxu0 %v1723
    %2843 = vmatprep.subr.bf16.mxu0 0
    %2844 = vmatpush2.bf16.msra.mxu0 %v1828
    %2845 = vmatprep.subr.bf16.mxu0 0
    %2846 = vmatpush2.bf16.msra.mxu0 %v1821
    %2847 = vmatprep.subr.bf16.mxu0 0
    %2848 = vmatpush2.bf16.msra.mxu0 %v1814
    %2849 = vmatprep.subr.bf16.mxu0 0
    %2850 = vmatpush2.bf16.msra.mxu0 %v1807
    %2851 = vmatprep.subr.bf16.mxu0 0
    %2852 = vmatpush2.bf16.msra.mxu0 %v1800
    %2853 = vmatprep.subr.bf16.mxu0 0
    %2854 = vmatpush2.bf16.msra.mxu0 %v1793
    %2855 = vmatprep.subr.bf16.mxu0 0
    %2856 = vmatpush2.bf16.msra.mxu0 %v1786
    %2857 = vmatprep.subr.bf16.mxu0 0
    %2858 = vmatpush2.bf16.msra.mxu0 %v1779
    %2859 = vmatprep.mubr.bf16.mxu0 %v94
    %2860 = vmatmul.mubr.bf16.gmra.mxu0 %v93
    %v2861 = vpop.f32.mrf.mxu0
    %v2862 = vadd.f32 %v2822, %v2861
    %v2863 = vpop.f32.mrf.mxu0
    %v2864 = vpop.f32.mrf.mxu0
    %v2865 = vpop.f32.mrf.mxu0
    %2866 = vdwg.mxu0
    %2867 = vmatprep.subr.bf16.mxu0 0
    %2868 = vmatpush1.bf16.msra.mxu0 %v1884
    %2869 = vmatprep.subr.bf16.mxu0 0
    %2870 = vmatpush1.bf16.msra.mxu0 %v1877
    %2871 = vmatprep.subr.bf16.mxu0 0
    %2872 = vmatpush1.bf16.msra.mxu0 %v1870
    %2873 = vmatprep.subr.bf16.mxu0 0
    %2874 = vmatpush1.bf16.msra.mxu0 %v1863
    %2875 = vmatprep.subr.bf16.mxu0 0
    %2876 = vmatpush1.bf16.msra.mxu0 %v1856
    %2877 = vmatprep.subr.bf16.mxu0 0
    %2878 = vmatpush1.bf16.msra.mxu0 %v1849
    %2879 = vmatprep.subr.bf16.mxu0 0
    %2880 = vmatpush1.bf16.msra.mxu0 %v1842
    %2881 = vmatprep.subr.bf16.mxu0 0
    %2882 = vmatpush1.bf16.msra.mxu0 %v1835
    %2883 = vmatprep.subr.bf16.mxu0 0
    %2884 = vmatpush2.bf16.msra.mxu0 %v1940
    %2885 = vmatprep.subr.bf16.mxu0 0
    %2886 = vmatpush2.bf16.msra.mxu0 %v1933
    %2887 = vmatprep.subr.bf16.mxu0 0
    %2888 = vmatpush2.bf16.msra.mxu0 %v1926
    %2889 = vmatprep.subr.bf16.mxu0 0
    %2890 = vmatpush2.bf16.msra.mxu0 %v1919
    %2891 = vmatprep.subr.bf16.mxu0 0
    %2892 = vmatpush2.bf16.msra.mxu0 %v1912
    %2893 = vmatprep.subr.bf16.mxu0 0
    %2894 = vmatpush2.bf16.msra.mxu0 %v1905
    %2895 = vmatprep.subr.bf16.mxu0 0
    %2896 = vmatpush2.bf16.msra.mxu0 %v1898
    %2897 = vmatprep.subr.bf16.mxu0 0
    %2898 = vmatpush2.bf16.msra.mxu0 %v1891
    %2899 = vmatprep.mubr.bf16.mxu0 %v96
    %2900 = vmatmul.mubr.bf16.gmra.mxu0 %v95
    %v2901 = vpop.f32.mrf.mxu0
    %v2902 = vadd.f32 %v2862, %v2901
    %v2903 = vpop.f32.mrf.mxu0
    %v2904 = vpop.f32.mrf.mxu0
    %v2905 = vpop.f32.mrf.mxu0
    %2906 = vdwg.mxu0
    %2907 = vmatprep.subr.bf16.mxu0 0
    %2908 = vmatpush1.bf16.msra.mxu0 0
    %2909 = vmatprep.subr.bf16.mxu0 0
    %2910 = vmatpush1.bf16.msra.mxu0 0
    %2911 = vmatprep.subr.bf16.mxu0 0
    %2912 = vmatpush1.bf16.msra.mxu0 0
    %2913 = vmatprep.subr.bf16.mxu0 0
    %2914 = vmatpush1.bf16.msra.mxu0 0
    %2915 = vmatprep.subr.bf16.mxu0 0
    %2916 = vmatpush1.bf16.msra.mxu0 0
    %2917 = vmatprep.subr.bf16.mxu0 0
    %2918 = vmatpush1.bf16.msra.mxu0 0
    %2919 = vmatprep.subr.bf16.mxu0 0
    %2920 = vmatpush1.bf16.msra.mxu0 0
    %2921 = vmatprep.subr.bf16.mxu0 0
    %2922 = vmatpush1.bf16.msra.mxu0 %v1947
    %2923 = vmatprep.subr.bf16.mxu0 0
    %2924 = vmatpush2.bf16.msra.mxu0 0
    %2925 = vmatprep.subr.bf16.mxu0 0
    %2926 = vmatpush2.bf16.msra.mxu0 0
    %2927 = vmatprep.subr.bf16.mxu0 0
    %2928 = vmatpush2.bf16.msra.mxu0 0
    %2929 = vmatprep.subr.bf16.mxu0 0
    %2930 = vmatpush2.bf16.msra.mxu0 0
    %2931 = vmatprep.subr.bf16.mxu0 0
    %2932 = vmatpush2.bf16.msra.mxu0 0
    %2933 = vmatprep.subr.bf16.mxu0 0
    %2934 = vmatpush2.bf16.msra.mxu0 0
    %2935 = vmatprep.subr.bf16.mxu0 0
    %2936 = vmatpush2.bf16.msra.mxu0 0
    %2937 = vmatprep.subr.bf16.mxu0 0
    %2938 = vmatpush2.bf16.msra.mxu0 0
    %2939 = vmatprep.mubr.bf16.mxu0 0
    %2940 = vmatmul.mubr.bf16.gmra.mxu0 %v2293
    %v2941 = vpop.f32.mrf.mxu0
    %v2942 = vadd.f32 %v2902, %v2941
    %v2943 = vpop.f32.mrf.mxu0
    %v2944 = vpop.f32.mrf.mxu0
    %v2945 = vpop.f32.mrf.mxu0
    %2946 = vdwg.mxu0
    %v2947 = vmax.f32 %v2453, 0.0
    %v2948 = vmax.f32 %v2455, 0.0
    %v2949 = vmax.f32 %v2617, 0.0
    %v2950 = vmax.f32 %v2619, 0.0
    %v2951 = vmax.f32 %v2781, 0.0
    %v2952 = vmax.f32 %v2783, 0.0
    %v2953 = vmax.f32 %v2942, 0.0
    %v2954 = vpack.c.bf16 %v2947, %v2947
    %v2955 = vpack.c.bf16 %v2948, %v2948
    %v2956 = vpack.c.bf16 %v2949, %v2949
    %v2957 = vpack.c.bf16 %v2950, %v2950
    %v2958 = vpack.c.bf16 %v2951, %v2951
    %v2959 = vpack.c.bf16 %v2952, %v2952
    %v2960 = vpack.c.bf16 %v2953, %v2953
    %v2961 = vld [vmem:[#allocation8] sm:$0xf]
    %v2962 = vld [vmem:[#allocation8 + $0x4] sm:$0xf]
    %v2963 = vld [vmem:[#allocation8 + $0x8] sm:$0xf]
    %v2964 = vld [vmem:[#allocation8 + $0xc] sm:$0xf]
    %v2965 = vld [vmem:[#allocation8 + $0x10] sm:$0xf]
    %v2966 = vld [vmem:[#allocation8 + $0x14] sm:$0xf]
    %v2967 = vld [vmem:[#allocation8 + $0x18] sm:$0xf]
    %v2968 = vld [vmem:[#allocation8 + $0x1c] sm:$0xf]
    %v2969 = vld [vmem:[#allocation8 + $0x20] sm:$0xf]
    %v2970 = vld [vmem:[#allocation8 + $0x24] sm:$0xf]
    %v2971 = vld [vmem:[#allocation8 + $0x28] sm:$0xf]
    %v2972 = vld [vmem:[#allocation8 + $0x2c] sm:$0xf]
    %v2973 = vld [vmem:[#allocation8 + $0x30] sm:$0xf]
    %v2974 = vld [vmem:[#allocation8 + $0x34] sm:$0xf]
    %v2975 = vld [vmem:[#allocation8 + $0x38] sm:$0xf]
    %v2976 = vld [vmem:[#allocation8 + $0x3c] sm:$0xf]
    %v2977 = vld [vmem:[#allocation8 + $0x40] sm:$0xf]
    %v2978 = vld [vmem:[#allocation8 + $0x44] sm:$0xf]
    %v2979 = vld [vmem:[#allocation8 + $0x48] sm:$0xf]
    %v2980 = vld [vmem:[#allocation8 + $0x4c] sm:$0xf]
    %v2981 = vld [vmem:[#allocation8 + $0x50] sm:$0xf]
    %v2982 = vld [vmem:[#allocation8 + $0x54] sm:$0xf]
    %v2983 = vld [vmem:[#allocation8 + $0x58] sm:$0xf]
    %v2984 = vld [vmem:[#allocation8 + $0x5c] sm:$0xf]
    %v2985 = vld [vmem:[#allocation8 + $0x60] sm:$0xf]
    %v2986 = vld [vmem:[#allocation8 + $0x64] sm:$0xf]
    %v2987 = vld [vmem:[#allocation8 + $0x68] sm:$0xf]
    %v2988 = vld [vmem:[#allocation8 + $0x6c] sm:$0xf]
    %v2989 = vld [vmem:[#allocation8 + $0x70] sm:$0xf]
    %v2990 = vld [vmem:[#allocation8 + $0x74] sm:$0xf]
    %v2991 = vld [vmem:[#allocation8 + $0x78] sm:$0xf]
    %v2992 = vld [vmem:[#allocation8 + $0x7c] sm:$0xf]
    %v2993 = vld [vmem:[#allocation8 + $0x80] sm:$0xf]
    %v2994 = vld [vmem:[#allocation8 + $0x84] sm:$0xf]
    %v2995 = vld [vmem:[#allocation8 + $0x88] sm:$0xf]
    %v2996 = vld [vmem:[#allocation8 + $0x8c] sm:$0xf]
    %v2997 = vld [vmem:[#allocation8 + $0x90] sm:$0xf]
    %v2998 = vld [vmem:[#allocation8 + $0x94] sm:$0xf]
    %v2999 = vld [vmem:[#allocation8 + $0x98] sm:$0xf]
    %v3000 = vld [vmem:[#allocation8 + $0x9c] sm:$0xf]
    %v3001 = vld [vmem:[#allocation8 + $0xa0] sm:$0xf]
    %v3002 = vld [vmem:[#allocation8 + $0xa4] sm:$0xf]
    %v3003 = vld [vmem:[#allocation8 + $0xa8] sm:$0xf]
    %v3004 = vld [vmem:[#allocation8 + $0xac] sm:$0xf]
    %v3005 = vld [vmem:[#allocation8 + $0xb0] sm:$0xf]
    %v3006 = vld [vmem:[#allocation8 + $0xb4] sm:$0xf]
    %v3007 = vld [vmem:[#allocation8 + $0xb8] sm:$0xf]
    %v3008 = vld [vmem:[#allocation8 + $0xbc] sm:$0xf]
    %v3009 = vld [vmem:[#allocation8 + $0xc0] sm:$0xf]
    %v3010 = vld [vmem:[#allocation8 + $0xc4] sm:$0xf]
    %v3011 = vld [vmem:[#allocation8 + $0xc8] sm:$0xf]
    %v3012 = vld [vmem:[#allocation8 + $0xcc] sm:$0xf]
    %v3013 = vld [vmem:[#allocation8 + $0xd0] sm:$0xf]
    %v3014 = vld [vmem:[#allocation8 + $0xd4] sm:$0xf]
    %v3015 = vld [vmem:[#allocation8 + $0xd8] sm:$0xf]
    %v3016 = vld [vmem:[#allocation8 + $0xdc] sm:$0xf]
    %v3017 = vld [vmem:[#allocation8 + $0xe0] sm:$0xf]
    %v3018 = vld [vmem:[#allocation8 + $0xe4] sm:$0xf]
    %v3019 = vld [vmem:[#allocation8 + $0xe8] sm:$0xf]
    %v3020 = vld [vmem:[#allocation8 + $0xec] sm:$0xf]
    %v3021 = vld [vmem:[#allocation8 + $0xf0] sm:$0xf]
    %v3022 = vld [vmem:[#allocation8 + $0xf4] sm:$0xf]
    %v3023 = vld [vmem:[#allocation8 + $0xf8] sm:$0xf]
    %v3024 = vld [vmem:[#allocation8 + $0xfc] sm:$0xf]
    %v3025 = vld [vmem:[#allocation8 + $0x100] sm:$0xf]
    %v3026 = vld [vmem:[#allocation8 + $0x104] sm:$0xf]
    %v3027 = vld [vmem:[#allocation8 + $0x108] sm:$0xf]
    %v3028 = vld [vmem:[#allocation8 + $0x10c] sm:$0xf]
    %v3029 = vld [vmem:[#allocation8 + $0x110] sm:$0xf]
    %v3030 = vld [vmem:[#allocation8 + $0x114] sm:$0xf]
    %v3031 = vld [vmem:[#allocation8 + $0x118] sm:$0xf]
    %v3032 = vld [vmem:[#allocation8 + $0x11c] sm:$0xf]
    %v3033 = vld [vmem:[#allocation8 + $0x120] sm:$0xf]
    %v3034 = vld [vmem:[#allocation8 + $0x124] sm:$0xf]
    %v3035 = vld [vmem:[#allocation8 + $0x128] sm:$0xf]
    %v3036 = vld [vmem:[#allocation8 + $0x12c] sm:$0xf]
    %v3037 = vld [vmem:[#allocation8 + $0x130] sm:$0xf]
    %v3038 = vld [vmem:[#allocation8 + $0x134] sm:$0xf]
    %v3039 = vld [vmem:[#allocation8 + $0x138] sm:$0xf]
    %v3040 = vld [vmem:[#allocation8 + $0x13c] sm:$0xf]
    %v3041 = vld [vmem:[#allocation8 + $0x140] sm:$0xf]
    %v3042 = vld [vmem:[#allocation8 + $0x144] sm:$0xf]
    %v3043 = vld [vmem:[#allocation8 + $0x148] sm:$0xf]
    %v3044 = vld [vmem:[#allocation8 + $0x14c] sm:$0xf]
    %v3045 = vld [vmem:[#allocation8 + $0x150] sm:$0xf]
    %v3046 = vld [vmem:[#allocation8 + $0x154] sm:$0xf]
    %v3047 = vld [vmem:[#allocation8 + $0x158] sm:$0xf]
    %v3048 = vld [vmem:[#allocation8 + $0x15c] sm:$0xf]
    %v3049 = vld [vmem:[#allocation8 + $0x160] sm:$0xf]
    %v3050 = vld [vmem:[#allocation8 + $0x164] sm:$0xf]
    %v3051 = vld [vmem:[#allocation8 + $0x168] sm:$0xf]
    %v3052 = vld [vmem:[#allocation8 + $0x16c] sm:$0xf]
    %v3053 = vld [vmem:[#allocation8 + $0x170] sm:$0xf]
    %v3054 = vld [vmem:[#allocation8 + $0x174] sm:$0xf]
    %v3055 = vld [vmem:[#allocation8 + $0x178] sm:$0xf]
    %v3056 = vld [vmem:[#allocation8 + $0x17c] sm:$0xf]
    %v3057 = vld [vmem:[#allocation8 + $0x180] sm:$0xf]
    %v3058 = vld [vmem:[#allocation8 + $0x184] sm:$0xf]
    %v3059 = vld [vmem:[#allocation8 + $0x188] sm:$0xf]
    %v3060 = vld [vmem:[#allocation8 + $0x18c] sm:$0xf]
    %v3061 = vld [vmem:[#allocation10] sm:$0x1]
    %v3063 = vlaneseq
    %v3064 = vshrl.u32 %v3063, 7
    %v3065 = vsub.s32 0, %v3064
    %v3066 = vrot.slane %v3061, %v3065
    %v3168 = vunpack.c.l.b16 %v2961
    %v3169 = vunpack.c.l.b16 %v2962
    %v3170 = vunpack.c.l.b16 %v2963
    %v3171 = vunpack.c.l.b16 %v2964
    %v3172 = vunpack.c.l.b16 %v2965
    %v3173 = vunpack.c.l.b16 %v2966
    %v3174 = vunpack.c.l.b16 %v2967
    %v3175 = vunpack.c.l.b16 %v2968
    %v3176 = vunpack.c.l.b16 %v2969
    %v3177 = vunpack.c.l.b16 %v2970
    %v3178 = vunpack.c.l.b16 %v2971
    %v3179 = vunpack.c.l.b16 %v2972
    %v3180 = vunpack.c.l.b16 %v2973
    %v3181 = vunpack.c.l.b16 %v2974
    %v3182 = vunpack.c.l.b16 %v2975
    %v3183 = vunpack.c.l.b16 %v2976
    %v3184 = vunpack.c.l.b16 %v2977
    %v3185 = vunpack.c.l.b16 %v2978
    %v3186 = vunpack.c.l.b16 %v2979
    %v3187 = vunpack.c.l.b16 %v2980
    %v3188 = vunpack.c.l.b16 %v2981
    %v3189 = vunpack.c.l.b16 %v2982
    %v3190 = vunpack.c.l.b16 %v2983
    %v3191 = vunpack.c.l.b16 %v2984
    %v3192 = vunpack.c.l.b16 %v2985
    %v3193 = vunpack.c.l.b16 %v2986
    %v3194 = vunpack.c.l.b16 %v2987
    %v3195 = vunpack.c.l.b16 %v2988
    %v3196 = vunpack.c.l.b16 %v2989
    %v3197 = vunpack.c.l.b16 %v2990
    %v3198 = vunpack.c.l.b16 %v2991
    %v3199 = vunpack.c.l.b16 %v2992
    %v3200 = vunpack.c.l.b16 %v2993
    %v3201 = vunpack.c.l.b16 %v2994
    %v3202 = vunpack.c.l.b16 %v2995
    %v3203 = vunpack.c.l.b16 %v2996
    %v3204 = vunpack.c.l.b16 %v2997
    %v3205 = vunpack.c.l.b16 %v2998
    %v3206 = vunpack.c.l.b16 %v2999
    %v3207 = vunpack.c.l.b16 %v3000
    %v3208 = vunpack.c.l.b16 %v3001
    %v3209 = vunpack.c.l.b16 %v3002
    %v3210 = vunpack.c.l.b16 %v3003
    %v3211 = vunpack.c.l.b16 %v3004
    %v3212 = vunpack.c.l.b16 %v3005
    %v3213 = vunpack.c.l.b16 %v3006
    %v3214 = vunpack.c.l.b16 %v3007
    %v3215 = vunpack.c.l.b16 %v3008
    %v3216 = vunpack.c.l.b16 %v3009
    %v3217 = vunpack.c.l.b16 %v3010
    %v3218 = vunpack.c.l.b16 %v3011
    %v3219 = vunpack.c.l.b16 %v3012
    %v3220 = vunpack.c.l.b16 %v3013
    %v3221 = vunpack.c.l.b16 %v3014
    %v3222 = vunpack.c.l.b16 %v3015
    %v3223 = vunpack.c.l.b16 %v3016
    %v3224 = vunpack.c.l.b16 %v3017
    %v3225 = vunpack.c.l.b16 %v3018
    %v3226 = vunpack.c.l.b16 %v3019
    %v3227 = vunpack.c.l.b16 %v3020
    %v3228 = vunpack.c.l.b16 %v3021
    %v3229 = vunpack.c.l.b16 %v3022
    %v3230 = vunpack.c.l.b16 %v3023
    %v3231 = vunpack.c.l.b16 %v3024
    %v3232 = vunpack.c.l.b16 %v3025
    %v3233 = vunpack.c.l.b16 %v3026
    %v3234 = vunpack.c.l.b16 %v3027
    %v3235 = vunpack.c.l.b16 %v3028
    %v3236 = vunpack.c.l.b16 %v3029
    %v3237 = vunpack.c.l.b16 %v3030
    %v3238 = vunpack.c.l.b16 %v3031
    %v3239 = vunpack.c.l.b16 %v3032
    %v3240 = vunpack.c.l.b16 %v3033
    %v3241 = vunpack.c.l.b16 %v3034
    %v3242 = vunpack.c.l.b16 %v3035
    %v3243 = vunpack.c.l.b16 %v3036
    %v3244 = vunpack.c.l.b16 %v3037
    %v3245 = vunpack.c.l.b16 %v3038
    %v3246 = vunpack.c.l.b16 %v3039
    %v3247 = vunpack.c.l.b16 %v3040
    %v3248 = vunpack.c.l.b16 %v3041
    %v3249 = vunpack.c.l.b16 %v3042
    %v3250 = vunpack.c.l.b16 %v3043
    %v3251 = vunpack.c.l.b16 %v3044
    %v3252 = vunpack.c.l.b16 %v3045
    %v3253 = vunpack.c.l.b16 %v3046
    %v3254 = vunpack.c.l.b16 %v3047
    %v3255 = vunpack.c.l.b16 %v3048
    %v3256 = vunpack.c.l.b16 %v3049
    %v3257 = vunpack.c.l.b16 %v3050
    %v3258 = vunpack.c.l.b16 %v3051
    %v3259 = vunpack.c.l.b16 %v3052
    %v3260 = vunpack.c.l.b16 %v3053
    %v3261 = vunpack.c.l.b16 %v3054
    %v3262 = vunpack.c.l.b16 %v3055
    %v3263 = vunpack.c.l.b16 %v3056
    %v3264 = vunpack.c.l.b16 %v3057
    %v3265 = vunpack.c.l.b16 %v3058
    %v3266 = vunpack.c.l.b16 %v3059
    %v3267 = vunpack.c.l.b16 %v3060
    %v3268 = vpack.c.b16 %v3169, %v3168
    %v3269 = vpack.c.b16 %v3171, %v3170
    %v3270 = vpack.c.b16 %v3173, %v3172
    %v3271 = vpack.c.b16 %v3175, %v3174
    %v3272 = vpack.c.b16 %v3177, %v3176
    %v3273 = vpack.c.b16 %v3179, %v3178
    %v3274 = vpack.c.b16 %v3181, %v3180
    %v3275 = vpack.c.b16 %v3183, %v3182
    %v3276 = vpack.c.b16 %v3185, %v3184
    %v3277 = vpack.c.b16 %v3187, %v3186
    %v3278 = vpack.c.b16 %v3189, %v3188
    %v3279 = vpack.c.b16 %v3191, %v3190
    %v3280 = vpack.c.b16 %v3193, %v3192
    %v3281 = vpack.c.b16 %v3195, %v3194
    %v3282 = vpack.c.b16 %v3197, %v3196
    %v3283 = vpack.c.b16 %v3199, %v3198
    %v3284 = vpack.c.b16 %v3201, %v3200
    %v3285 = vpack.c.b16 %v3203, %v3202
    %v3286 = vpack.c.b16 %v3205, %v3204
    %v3287 = vpack.c.b16 %v3207, %v3206
    %v3288 = vpack.c.b16 %v3209, %v3208
    %v3289 = vpack.c.b16 %v3211, %v3210
    %v3290 = vpack.c.b16 %v3213, %v3212
    %v3291 = vpack.c.b16 %v3215, %v3214
    %v3292 = vpack.c.b16 %v3217, %v3216
    %v3293 = vpack.c.b16 %v3219, %v3218
    %v3294 = vpack.c.b16 %v3221, %v3220
    %v3295 = vpack.c.b16 %v3223, %v3222
    %v3296 = vpack.c.b16 %v3225, %v3224
    %v3297 = vpack.c.b16 %v3227, %v3226
    %v3298 = vpack.c.b16 %v3229, %v3228
    %v3299 = vpack.c.b16 %v3231, %v3230
    %v3300 = vpack.c.b16 %v3233, %v3232
    %v3301 = vpack.c.b16 %v3235, %v3234
    %v3302 = vpack.c.b16 %v3237, %v3236
    %v3303 = vpack.c.b16 %v3239, %v3238
    %v3304 = vpack.c.b16 %v3241, %v3240
    %v3305 = vpack.c.b16 %v3243, %v3242
    %v3306 = vpack.c.b16 %v3245, %v3244
    %v3307 = vpack.c.b16 %v3247, %v3246
    %v3308 = vpack.c.b16 %v3249, %v3248
    %v3309 = vpack.c.b16 %v3251, %v3250
    %v3310 = vpack.c.b16 %v3253, %v3252
    %v3311 = vpack.c.b16 %v3255, %v3254
    %v3312 = vpack.c.b16 %v3257, %v3256
    %v3313 = vpack.c.b16 %v3259, %v3258
    %v3314 = vpack.c.b16 %v3261, %v3260
    %v3315 = vpack.c.b16 %v3263, %v3262
    %v3316 = vpack.c.b16 %v3265, %v3264
    %v3317 = vpack.c.b16 %v3267, %v3266
    %vm3368 = vcmask 261120
    %v3370 = vsel %vm3368, %v2960, 0
    %3372 = vmatprep.subr.bf16.mxu0 0
    %3373 = vmatpush1.bf16.msra.mxu0 %v3275
    %3374 = vmatprep.subr.bf16.mxu0 0
    %3375 = vmatpush1.bf16.msra.mxu0 %v3274
    %3376 = vmatprep.subr.bf16.mxu0 0
    %3377 = vmatpush1.bf16.msra.mxu0 %v3273
    %3378 = vmatprep.subr.bf16.mxu0 0
    %3379 = vmatpush1.bf16.msra.mxu0 %v3272
    %3380 = vmatprep.subr.bf16.mxu0 0
    %3381 = vmatpush1.bf16.msra.mxu0 %v3271
    %3382 = vmatprep.subr.bf16.mxu0 0
    %3383 = vmatpush1.bf16.msra.mxu0 %v3270
    %3384 = vmatprep.subr.bf16.mxu0 0
    %3385 = vmatpush1.bf16.msra.mxu0 %v3269
    %3386 = vmatprep.subr.bf16.mxu0 0
    %3387 = vmatpush1.bf16.msra.mxu0 %v3268
    %3388 = vmatprep.subr.bf16.mxu0 0
    %3389 = vmatpush2.bf16.msra.mxu0 %v3283
    %3390 = vmatprep.subr.bf16.mxu0 0
    %3391 = vmatpush2.bf16.msra.mxu0 %v3282
    %3392 = vmatprep.subr.bf16.mxu0 0
    %3393 = vmatpush2.bf16.msra.mxu0 %v3281
    %3394 = vmatprep.subr.bf16.mxu0 0
    %3395 = vmatpush2.bf16.msra.mxu0 %v3280
    %3396 = vmatprep.subr.bf16.mxu0 0
    %3397 = vmatpush2.bf16.msra.mxu0 %v3279
    %3398 = vmatprep.subr.bf16.mxu0 0
    %3399 = vmatpush2.bf16.msra.mxu0 %v3278
    %3400 = vmatprep.subr.bf16.mxu0 0
    %3401 = vmatpush2.bf16.msra.mxu0 %v3277
    %3402 = vmatprep.subr.bf16.mxu0 0
    %3403 = vmatpush2.bf16.msra.mxu0 %v3276
    %3404 = vmatprep.mubr.bf16.mxu0 %v2955
    %3405 = vmatmul.mubr.bf16.gmra.mxu0 %v2954
    %v3406 = vpop.f32.mrf.mxu0
    %v3407 = vadd.f32 %v3066, %v3406
    %v3408 = vpop.f32.mrf.mxu0
    %v3409 = vpop.f32.mrf.mxu0
    %v3410 = vpop.f32.mrf.mxu0
    %3411 = vdwg.mxu0
    %3412 = vmatprep.subr.bf16.mxu0 0
    %3413 = vmatpush1.bf16.msra.mxu0 %v3291
    %3414 = vmatprep.subr.bf16.mxu0 0
    %3415 = vmatpush1.bf16.msra.mxu0 %v3290
    %3416 = vmatprep.subr.bf16.mxu0 0
    %3417 = vmatpush1.bf16.msra.mxu0 %v3289
    %3418 = vmatprep.subr.bf16.mxu0 0
    %3419 = vmatpush1.bf16.msra.mxu0 %v3288
    %3420 = vmatprep.subr.bf16.mxu0 0
    %3421 = vmatpush1.bf16.msra.mxu0 %v3287
    %3422 = vmatprep.subr.bf16.mxu0 0
    %3423 = vmatpush1.bf16.msra.mxu0 %v3286
    %3424 = vmatprep.subr.bf16.mxu0 0
    %3425 = vmatpush1.bf16.msra.mxu0 %v3285
    %3426 = vmatprep.subr.bf16.mxu0 0
    %3427 = vmatpush1.bf16.msra.mxu0 %v3284
    %3428 = vmatprep.subr.bf16.mxu0 0
    %3429 = vmatpush2.bf16.msra.mxu0 %v3299
    %3430 = vmatprep.subr.bf16.mxu0 0
    %3431 = vmatpush2.bf16.msra.mxu0 %v3298
    %3432 = vmatprep.subr.bf16.mxu0 0
    %3433 = vmatpush2.bf16.msra.mxu0 %v3297
    %3434 = vmatprep.subr.bf16.mxu0 0
    %3435 = vmatpush2.bf16.msra.mxu0 %v3296
    %3436 = vmatprep.subr.bf16.mxu0 0
    %3437 = vmatpush2.bf16.msra.mxu0 %v3295
    %3438 = vmatprep.subr.bf16.mxu0 0
    %3439 = vmatpush2.bf16.msra.mxu0 %v3294
    %3440 = vmatprep.subr.bf16.mxu0 0
    %3441 = vmatpush2.bf16.msra.mxu0 %v3293
    %3442 = vmatprep.subr.bf16.mxu0 0
    %3443 = vmatpush2.bf16.msra.mxu0 %v3292
    %3444 = vmatprep.mubr.bf16.mxu0 %v2957
    %3445 = vmatmul.mubr.bf16.gmra.mxu0 %v2956
    %v3446 = vpop.f32.mrf.mxu0
    %v3447 = vadd.f32 %v3407, %v3446
    %v3448 = vpop.f32.mrf.mxu0
    %v3449 = vpop.f32.mrf.mxu0
    %v3450 = vpop.f32.mrf.mxu0
    %3451 = vdwg.mxu0
    %3452 = vmatprep.subr.bf16.mxu0 0
    %3453 = vmatpush1.bf16.msra.mxu0 %v3307
    %3454 = vmatprep.subr.bf16.mxu0 0
    %3455 = vmatpush1.bf16.msra.mxu0 %v3306
    %3456 = vmatprep.subr.bf16.mxu0 0
    %3457 = vmatpush1.bf16.msra.mxu0 %v3305
    %3458 = vmatprep.subr.bf16.mxu0 0
    %3459 = vmatpush1.bf16.msra.mxu0 %v3304
    %3460 = vmatprep.subr.bf16.mxu0 0
    %3461 = vmatpush1.bf16.msra.mxu0 %v3303
    %3462 = vmatprep.subr.bf16.mxu0 0
    %3463 = vmatpush1.bf16.msra.mxu0 %v3302
    %3464 = vmatprep.subr.bf16.mxu0 0
    %3465 = vmatpush1.bf16.msra.mxu0 %v3301
    %3466 = vmatprep.subr.bf16.mxu0 0
    %3467 = vmatpush1.bf16.msra.mxu0 %v3300
    %3468 = vmatprep.subr.bf16.mxu0 0
    %3469 = vmatpush2.bf16.msra.mxu0 %v3315
    %3470 = vmatprep.subr.bf16.mxu0 0
    %3471 = vmatpush2.bf16.msra.mxu0 %v3314
    %3472 = vmatprep.subr.bf16.mxu0 0
    %3473 = vmatpush2.bf16.msra.mxu0 %v3313
    %3474 = vmatprep.subr.bf16.mxu0 0
    %3475 = vmatpush2.bf16.msra.mxu0 %v3312
    %3476 = vmatprep.subr.bf16.mxu0 0
    %3477 = vmatpush2.bf16.msra.mxu0 %v3311
    %3478 = vmatprep.subr.bf16.mxu0 0
    %3479 = vmatpush2.bf16.msra.mxu0 %v3310
    %3480 = vmatprep.subr.bf16.mxu0 0
    %3481 = vmatpush2.bf16.msra.mxu0 %v3309
    %3482 = vmatprep.subr.bf16.mxu0 0
    %3483 = vmatpush2.bf16.msra.mxu0 %v3308
    %3484 = vmatprep.mubr.bf16.mxu0 %v2959
    %3485 = vmatmul.mubr.bf16.gmra.mxu0 %v2958
    %v3486 = vpop.f32.mrf.mxu0
    %v3487 = vadd.f32 %v3447, %v3486
    %v3488 = vpop.f32.mrf.mxu0
    %v3489 = vpop.f32.mrf.mxu0
    %v3490 = vpop.f32.mrf.mxu0
    %3491 = vdwg.mxu0
    %3492 = vmatprep.subr.bf16.mxu0 0
    %3493 = vmatpush1.bf16.msra.mxu0 0
    %3494 = vmatprep.subr.bf16.mxu0 0
    %3495 = vmatpush1.bf16.msra.mxu0 0
    %3496 = vmatprep.subr.bf16.mxu0 0
    %3497 = vmatpush1.bf16.msra.mxu0 0
    %3498 = vmatprep.subr.bf16.mxu0 0
    %3499 = vmatpush1.bf16.msra.mxu0 0
    %3500 = vmatprep.subr.bf16.mxu0 0
    %3501 = vmatpush1.bf16.msra.mxu0 0
    %3502 = vmatprep.subr.bf16.mxu0 0
    %3503 = vmatpush1.bf16.msra.mxu0 0
    %3504 = vmatprep.subr.bf16.mxu0 0
    %3505 = vmatpush1.bf16.msra.mxu0 %v3317
    %3506 = vmatprep.subr.bf16.mxu0 0
    %3507 = vmatpush1.bf16.msra.mxu0 %v3316
    %3508 = vmatprep.subr.bf16.mxu0 0
    %3509 = vmatpush2.bf16.msra.mxu0 0
    %3510 = vmatprep.subr.bf16.mxu0 0
    %3511 = vmatpush2.bf16.msra.mxu0 0
    %3512 = vmatprep.subr.bf16.mxu0 0
    %3513 = vmatpush2.bf16.msra.mxu0 0
    %3514 = vmatprep.subr.bf16.mxu0 0
    %3515 = vmatpush2.bf16.msra.mxu0 0
    %3516 = vmatprep.subr.bf16.mxu0 0
    %3517 = vmatpush2.bf16.msra.mxu0 0
    %3518 = vmatprep.subr.bf16.mxu0 0
    %3519 = vmatpush2.bf16.msra.mxu0 0
    %3520 = vmatprep.subr.bf16.mxu0 0
    %3521 = vmatpush2.bf16.msra.mxu0 0
    %3522 = vmatprep.subr.bf16.mxu0 0
    %3523 = vmatpush2.bf16.msra.mxu0 0
    %3524 = vmatprep.mubr.bf16.mxu0 0
    %3525 = vmatmul.mubr.bf16.gmra.mxu0 %v3370
    %v3526 = vpop.f32.mrf.mxu0
    %v3527 = vadd.f32 %v3487, %v3526
    %v3528 = vpop.f32.mrf.mxu0
    %v3529 = vpop.f32.mrf.mxu0
    %v3530 = vpop.f32.mrf.mxu0
    %3531 = vdwg.mxu0
    %3532 = vmax.xlane.f32.xlu0 %v3527
    %v3533 = vpop.xlane.xlu0 %3532
    %v3534 = vsub.f32 %v3527, %v3533
    %v3535 = vmul.f32 %v3534, 1.442695
    %v3536 = vpow.pop %v3535
    %3537 = vadd.xlane.f32.xlu0 %v3536
    %v3538 = vpop.xlane.xlu0 %3537
    %v3539 = vlog2.pop %v3538
    %v3540 = vmul.f32 %v3539, 0.6931472
    %v3541 = vsub.f32 %v3534, %v3540
    %3542 = vst [vmem:[#allocation11] sm:$0xff] %v3541
    // Predicated region
    $region42: #{tpu_custom_call.1} parent=1 // pred_check
      _
    $region43: #{tpu_custom_call.1} parent=1 // pred_check_branch
      %3544 = sbr.rel (0) target = $region45
    $region44: #{tpu_custom_call.1} parent=1 // pred_region
      %s3546 = ssub.s32 128, 128
      %3547 = vsyncadd [#allocation4], %s3546
      %s3549 = sshll.u32 [#allocation11], 4
      %s3550 = int_to_ptr.vmem [resolvable:$true] %s3549
      %3552 = dma.vmem_to_hbm [thread:$0]  %s3550, 128, %s5, [#allocation4]
    $region45: #{tpu_custom_call.1} parent=1 // pred_fallthru
      _
    // Predicated region
    $region46: #{tpu_custom_call.1} parent=1 // pred_check
      _
    $region47: #{tpu_custom_call.1} parent=1 // pred_check_branch
      %3554 = sbr.rel (0) target = $region49
    $region48: #{tpu_custom_call.1} parent=1 // pred_region
      %3555 = dma.done [#allocation4], 128
    $region49: #{tpu_custom_call.1} parent=1 // pred_fallthru
      _
    %3556 = vsyncpa [#allocation3], 1
    %3557 = vsyncpa [#allocation6], 1
    %3558 = vsyncpa [#allocation9], 1
    %3559 = vsyncpa [#allocation4], 1

</llo_original>
